<compile_context>
chip_gen: v7x
topology: tpu7x:2x2x1
jax: 0.10.0
libtpu: 0.0.40
codegen_flags: <defaults>
</compile_context>

<pallas_src>
from functools import partial

import jax
import jax.numpy as jnp
from jax.experimental import pallas as pl
from jax.experimental.pallas import tpu as pltpu


def _round_up(x, m):
    return (x + m - 1) // m * m


# ----------------------------------------------------------------------------
# Fused SIGN kernel: one node tile, all hops + projection.
# ----------------------------------------------------------------------------
def _sign_kernel(*refs, num_hops, n_hop_layers, n_proj_layers):
    it = iter(refs)
    alphas_ref = next(it)                                   # SMEM [num_hops + 2]
    feat_refs = [next(it) for _ in range(num_hops)]         # bf16 [TILE_N, in_feats]
    hop_wb = [[(next(it), next(it)) for _ in range(n_hop_layers)]
              for _ in range(num_hops)]                     # (W bf16, b f32[1,d])
    proj0_w = [next(it) for _ in range(num_hops)]           # per-hop slabs of Wp0
    proj0_b = next(it)
    proj_rest = [(next(it), next(it)) for _ in range(n_proj_layers - 1)]
    out_ref = next(it)

    cd = jnp.bfloat16                                        # MXU compute dtype

    def prelu(y, alpha_idx):
        a = alphas_ref[alpha_idx]                            # scalar from SMEM
        return jnp.where(y > 0, y, a * y)

    acc0 = None                                              # projection layer-0 acc
    for h in range(num_hops):
        x = feat_refs[h][...]                                # already bf16
        y = None
        for l, (w_ref, b_ref) in enumerate(hop_wb[h]):
            y = jnp.dot(x, w_ref[...],
                        preferred_element_type=jnp.float32) + b_ref[...]
            if l < n_hop_layers - 1:       # FFN-internal PReLU (+ eval dropout = id)
                x = prelu(y, h).astype(cd)   # bf16 right away -> small live f32 set
        # SIGN-level PReLU on this hop's output, then accumulate its slab
        # contribution to projection layer 0 (the concat is eliminated).
        z = prelu(y, num_hops).astype(cd)
        c = jnp.dot(z, proj0_w[h][...], preferred_element_type=jnp.float32)
        acc0 = c if acc0 is None else acc0 + c

    p = acc0 + proj0_b[...]
    for l, (w_ref, b_ref) in enumerate(proj_rest):
        p = prelu(p, num_hops + 1).astype(cd)   # PReLU after previous proj layer
        p = jnp.dot(p, w_ref[...], preferred_element_type=jnp.float32) + b_ref[...]
    out_ref[...] = p.astype(out_ref.dtype)


# ----------------------------------------------------------------------------
# Hardware-aware sizing helpers.
# ----------------------------------------------------------------------------
def _vmem_limit_bytes():
    """Per-generation scoped-VMEM budget (leave headroom for compiler temps)."""
    try:
        cap = int(getattr(pltpu.get_tpu_info(), "vmem_capacity_bytes", 64 << 20))
    except Exception:
        cap = 64 << 20
    # ~48 MiB on v7x (64 MiB physical), ~96 MiB on v5e/v6e (128 MiB physical).
    return int(min(cap - cap // 4, 100 << 20))


def _choose_tile_n(N, per_row_bytes, weight_vmem_bytes, vmem_limit):
    n8 = _round_up(max(N, 1), 8)
    budget = max(vmem_limit - weight_vmem_bytes - (4 << 20), 2 << 20)
    tile = 1024
    while tile > 16 and tile * per_row_bytes > budget:
        tile //= 2
    tile = min(tile, n8)
    # v7x megacore: keep >= 2 steps along the "parallel" node axis whenever the
    # graph is big enough, so both TensorCores get work (no-op on 1-TC chips).
    if tile >= n8 >= 32:
        tile = _round_up(n8 // 2, 16)
    return tile


# ----------------------------------------------------------------------------
# Build: prepare all static operands/specs ONCE; return feats-prep + forward.
# ----------------------------------------------------------------------------
def build_sign(params, N, in_feats, *, tile_n=None, single_buffer_weights=True):
    inception = params["inception"]
    project = params["project"]
    num_hops = len(inception)
    n_hop_layers = inception[0]["n_layers"]
    n_proj_layers = project["n_layers"]
    hidden = inception[0]["weights"][-1].shape[1]
    out_feats = project["weights"][-1].shape[1]
    assert project["weights"][0].shape[0] == num_hops * hidden

    f32, bf16 = jnp.float32, jnp.bfloat16
    out_pad = _round_up(out_feats, 128)
    # Narrow outputs: bf16 halves the 128-lane-padded write stream.
    out_dtype = bf16 if out_feats < 128 else f32
    out_isize = jnp.dtype(out_dtype).itemsize

    # ---- static weight operands (hoisted out of the per-call path) ---------
    weight_ops = []
    for ff in inception:                                     # hop FFNs
        for W, b in zip(ff["weights"], ff["biases"]):
            weight_ops += [W.astype(bf16), b.astype(f32).reshape(1, -1)]
    Wp0, bp0 = project["weights"][0], project["biases"][0]
    if n_proj_layers == 1 and Wp0.shape[1] != out_pad:
        Wp0 = jnp.pad(Wp0, ((0, 0), (0, out_pad - Wp0.shape[1])))
        bp0 = jnp.pad(bp0, ((0, out_pad - bp0.shape[0]),))
    for h in range(num_hops):                                # proj layer-0 slabs
        weight_ops.append(Wp0[h * hidden:(h + 1) * hidden, :].astype(bf16))
    weight_ops.append(bp0.astype(f32).reshape(1, -1))
    for l in range(1, n_proj_layers):                        # remaining proj layers
        W, b = project["weights"][l], project["biases"][l]
        if l == n_proj_layers - 1 and W.shape[1] != out_pad:
            W = jnp.pad(W, ((0, 0), (0, out_pad - W.shape[1])))
            b = jnp.pad(b, ((0, out_pad - b.shape[0]),))
        weight_ops += [W.astype(bf16), b.astype(f32).reshape(1, -1)]

    # PReLU alphas -> one small SMEM vector: [hop_0..hop_{H-1}, sign, project]
    alphas = jnp.stack(
        [ff["alpha"].astype(f32) for ff in inception]
        + [params["sign_alpha"].astype(f32), project["alpha"].astype(f32)])

    # ---- tiling / VMEM budget -----------------------------------------------
    weight_buf = 1 if (single_buffer_weights and hasattr(pl, "Buffered")) else 2
    weight_vmem = sum(int(w.size) * w.dtype.itemsize for w in weight_ops) * weight_buf
    all_ws = [w for ff in inception for w in ff["weights"]] + list(project["weights"])
    max_w = max([out_pad] + [W.shape[1] for W in all_ws])
    per_row = (num_hops * in_feats * 2 * 2     # bf16 feature tiles, double-buffered
               + out_pad * out_isize * 2       # output tile, double-buffered
               + 6 * max_w * 4)                # live f32/bf16 temporaries + slack
    vmem_limit = _vmem_limit_bytes()
    if tile_n is None:
        tile_n = _choose_tile_n(N, per_row, weight_vmem, vmem_limit)
    tile_n = max(8, min(_round_up(tile_n, 8), _round_up(N, 8)))
    n_pad = _round_up(N, tile_n)
    grid = (n_pad // tile_n,)

    # ---- BlockSpecs ----------------------------------------------------------
    def wspec(arr):
        if single_buffer_weights and hasattr(pl, "Buffered"):
            # Fetched once (constant index map) -> a single resident buffer.
            return pl.BlockSpec(arr.shape, lambda i: (0,) * arr.ndim,
                                pipeline_mode=pl.Buffered(1))
        return pl.BlockSpec(arr.shape, lambda i: (0,) * arr.ndim)

    in_specs = ([pl.BlockSpec(memory_space=pltpu.MemorySpace.SMEM)]
                + [pl.BlockSpec((tile_n, in_feats), lambda i: (i, 0))
                   for _ in range(num_hops)]
                + [wspec(w) for w in weight_ops])
    out_spec = pl.BlockSpec((tile_n, out_pad), lambda i: (i, 0))

    # ---- cost estimate (helps XLA schedule around the long custom call) -----
    flops_per_row = sum(2 * W.shape[0] * W.shape[1] for W in all_ws)
    bytes_accessed = (num_hops * n_pad * in_feats * 2
                      + sum(int(w.size) * w.dtype.itemsize for w in weight_ops)
                      + n_pad * out_pad * out_isize)
    cost = pl.CostEstimate(flops=int(flops_per_row * n_pad),
                           transcendentals=0,
                           bytes_accessed=int(bytes_accessed))

    kernel = partial(_sign_kernel, num_hops=num_hops,
                     n_hop_layers=n_hop_layers, n_proj_layers=n_proj_layers)
    call = pl.pallas_call(
        kernel,
        out_shape=jax.ShapeDtypeStruct((n_pad, out_pad), out_dtype),
        grid=grid,
        in_specs=in_specs,
        out_specs=out_spec,
        compiler_params=pltpu.CompilerParams(
            dimension_semantics=("parallel",),
            vmem_limit_bytes=int(vmem_limit)),
        cost_estimate=cost,
    )

    def prep_feats(feats):
        """Pad + cast the hop features ONCE (outside the per-call path)."""
        assert len(feats) == num_hops
        prepped = []
        for f in feats:
            fp = f.astype(bf16)
            if n_pad != N:
                fp = jnp.pad(fp, ((0, n_pad - N), (0, 0)))
            prepped.append(fp)
        return prepped

    def forward(feats_prepped):
        out = call(alphas, *feats_prepped, *weight_ops)
        return out[:N, :out_feats].astype(f32)

    return dict(prep_feats=prep_feats, forward=forward,
                tile_n=tile_n, n_pad=n_pad)


# ----------------------------------------------------------------------------
# Parameter init (matches FeedForwardNet.reset_parameters):
#   xavier_uniform with gain = calculate_gain('relu') = sqrt(2), zero biases,
#   PReLU alpha initialised to 0.25 (PyTorch default).
# ----------------------------------------------------------------------------
def _xavier_uniform(key, shape, gain):
    fan_in, fan_out = shape
    limit = gain * (6.0 / (fan_in + fan_out)) ** 0.5
    return jax.random.uniform(key, shape, jnp.float32, -limit, limit)


def init_ffn(key, in_feats, hidden, out_feats, n_layers):
    if n_layers == 1:
        dims = [(in_feats, out_feats)]
    else:
        dims = ([(in_feats, hidden)]
                + [(hidden, hidden)] * (n_layers - 2)
                + [(hidden, out_feats)])
    keys = jax.random.split(key, len(dims))
    gain = 2.0 ** 0.5
    return dict(weights=[_xavier_uniform(k, d, gain) for k, d in zip(keys, dims)],
                biases=[jnp.zeros((d[1],), jnp.float32) for d in dims],
                alpha=jnp.asarray(0.25, jnp.float32), n_layers=n_layers)


# ----------------------------------------------------------------------------
# Pure-JAX reference (f32) for a correctness check.
# ----------------------------------------------------------------------------
def _ffn_ref(ff, x):
    n = ff["n_layers"]
    for i, (W, b) in enumerate(zip(ff["weights"], ff["biases"])):
        x = x @ W + b
        if i < n - 1:
            x = jnp.where(x > 0, x, ff["alpha"] * x)
    return x


def sign_ref(params, feats):
    hs = [_ffn_ref(ff, f) for ff, f in zip(params["inception"], feats)]
    h = jnp.concatenate(hs, axis=-1)
    h = jnp.where(h > 0, h, params["sign_alpha"] * h)
    return _ffn_ref(params["project"], h)


if __name__ == "__main__":
    N = 8            # number of nodes
    in_feats = 32
    hidden = 32
    out_feats = 16
    num_hops = 3
    n_layers = 2
    # dropout / input_drop rates are irrelevant in eval mode (identity)

    key = jax.random.PRNGKey(0)
    k_params, k_feats = jax.random.split(key)

    ffn_keys = jax.random.split(k_params, num_hops + 1)
    inception = [init_ffn(ffn_keys[i], in_feats, hidden, hidden, n_layers)
                 for i in range(num_hops)]
    project = init_ffn(ffn_keys[-1], num_hops * hidden, hidden, out_feats,
                       n_layers)
    params = dict(inception=inception, project=project,
                  sign_alpha=jnp.asarray(0.25, jnp.float32))

    feat_keys = jax.random.split(k_feats, num_hops)
    feats = [jax.random.normal(feat_keys[i], (N, in_feats), jnp.float32)
             for i in range(num_hops)]

    def run(single_buffer_weights):
        sig = build_sign(params, N, in_feats,
                         single_buffer_weights=single_buffer_weights)
        feats_p = sig["prep_feats"](feats)      # pad + bf16-cast once, cached
        return jax.block_until_ready(sig["forward"](feats_p))

    try:
        out = run(True)
    except Exception:
        # pl.Buffered(1) not supported on this jax/libtpu: fall back to defaults.
        out = run(False)

    assert out.shape == (N, out_feats), out.shape
    assert bool(jnp.all(jnp.isfinite(out)))

    # bf16 MXU with f32 accumulation -> lenient tolerance vs the f32 reference.
    ref = sign_ref(params, feats)
    assert jnp.allclose(out, ref, rtol=0.1, atol=0.1), \
        float(jnp.max(jnp.abs(out - ref)))
    print("KERNEL_OK")
</pallas_src>

<mosaic_0001>
module attributes {stable_mosaic.version = 11 : i64} {
  func.func @_sign_kernel(%arg0: i32, %arg1: memref<5xf32, #tpu.memory_space<smem>>, %arg2: memref<8x32xbf16, #tpu.memory_space<vmem>>, %arg3: memref<8x32xbf16, #tpu.memory_space<vmem>>, %arg4: memref<8x32xbf16, #tpu.memory_space<vmem>>, %arg5: memref<32x32xbf16, #tpu.memory_space<vmem>>, %arg6: memref<1x32xf32, #tpu.memory_space<vmem>>, %arg7: memref<32x32xbf16, #tpu.memory_space<vmem>>, %arg8: memref<1x32xf32, #tpu.memory_space<vmem>>, %arg9: memref<32x32xbf16, #tpu.memory_space<vmem>>, %arg10: memref<1x32xf32, #tpu.memory_space<vmem>>, %arg11: memref<32x32xbf16, #tpu.memory_space<vmem>>, %arg12: memref<1x32xf32, #tpu.memory_space<vmem>>, %arg13: memref<32x32xbf16, #tpu.memory_space<vmem>>, %arg14: memref<1x32xf32, #tpu.memory_space<vmem>>, %arg15: memref<32x32xbf16, #tpu.memory_space<vmem>>, %arg16: memref<1x32xf32, #tpu.memory_space<vmem>>, %arg17: memref<32x32xbf16, #tpu.memory_space<vmem>>, %arg18: memref<32x32xbf16, #tpu.memory_space<vmem>>, %arg19: memref<32x32xbf16, #tpu.memory_space<vmem>>, %arg20: memref<1x32xf32, #tpu.memory_space<vmem>>, %arg21: memref<32x128xbf16, #tpu.memory_space<vmem>>, %arg22: memref<1x128xf32, #tpu.memory_space<vmem>>, %arg23: memref<8x128xbf16, #tpu.memory_space<vmem>>) attributes {dimension_semantics = [#tpu.dimension_semantics<parallel>], iteration_bounds = array<i64: 1>, scalar_prefetch = 0 : i64, scratch_operands = 0 : i64, tpu.core_type = #tpu.core_type<tc>, window_params = [{transform_indices = @transform_0, window_bounds = array<i64: 5>}, {transform_indices = @transform_1, window_bounds = array<i64: 8, 32>}, {transform_indices = @transform_2, window_bounds = array<i64: 8, 32>}, {transform_indices = @transform_3, window_bounds = array<i64: 8, 32>}, {pipeline_mode = #tpu.pipeline_mode<synchronous>, transform_indices = @transform_4, window_bounds = array<i64: 32, 32>}, {pipeline_mode = #tpu.pipeline_mode<synchronous>, transform_indices = @transform_5, window_bounds = array<i64: 1, 32>}, {pipeline_mode = #tpu.pipeline_mode<synchronous>, transform_indices = @transform_6, window_bounds = array<i64: 32, 32>}, {pipeline_mode = #tpu.pipeline_mode<synchronous>, transform_indices = @transform_7, window_bounds = array<i64: 1, 32>}, {pipeline_mode = #tpu.pipeline_mode<synchronous>, transform_indices = @transform_8, window_bounds = array<i64: 32, 32>}, {pipeline_mode = #tpu.pipeline_mode<synchronous>, transform_indices = @transform_9, window_bounds = array<i64: 1, 32>}, {pipeline_mode = #tpu.pipeline_mode<synchronous>, transform_indices = @transform_10, window_bounds = array<i64: 32, 32>}, {pipeline_mode = #tpu.pipeline_mode<synchronous>, transform_indices = @transform_11, window_bounds = array<i64: 1, 32>}, {pipeline_mode = #tpu.pipeline_mode<synchronous>, transform_indices = @transform_12, window_bounds = array<i64: 32, 32>}, {pipeline_mode = #tpu.pipeline_mode<synchronous>, transform_indices = @transform_13, window_bounds = array<i64: 1, 32>}, {pipeline_mode = #tpu.pipeline_mode<synchronous>, transform_indices = @transform_14, window_bounds = array<i64: 32, 32>}, {pipeline_mode = #tpu.pipeline_mode<synchronous>, transform_indices = @transform_15, window_bounds = array<i64: 1, 32>}, {pipeline_mode = #tpu.pipeline_mode<synchronous>, transform_indices = @transform_16, window_bounds = array<i64: 32, 32>}, {pipeline_mode = #tpu.pipeline_mode<synchronous>, transform_indices = @transform_17, window_bounds = array<i64: 32, 32>}, {pipeline_mode = #tpu.pipeline_mode<synchronous>, transform_indices = @transform_18, window_bounds = array<i64: 32, 32>}, {pipeline_mode = #tpu.pipeline_mode<synchronous>, transform_indices = @transform_19, window_bounds = array<i64: 1, 32>}, {pipeline_mode = #tpu.pipeline_mode<synchronous>, transform_indices = @transform_20, window_bounds = array<i64: 32, 128>}, {pipeline_mode = #tpu.pipeline_mode<synchronous>, transform_indices = @transform_21, window_bounds = array<i64: 1, 128>}, {transform_indices = @transform_22, window_bounds = array<i64: 8, 128>}]} {
    %c0 = arith.constant 0 : index
    %c0_0 = arith.constant 0 : index
    %0 = vector.load %arg2[%c0, %c0_0] : memref<8x32xbf16, #tpu.memory_space<vmem>>, vector<8x32xbf16>
    %c0_1 = arith.constant 0 : index
    %c0_2 = arith.constant 0 : index
    %1 = vector.load %arg5[%c0_1, %c0_2] : memref<32x32xbf16, #tpu.memory_space<vmem>>, vector<32x32xbf16>
    %cst = arith.constant dense<0.000000e+00> : vector<8x32xf32>
    %2 = tpu.matmul %0, %1, %cst {dimension_numbers = #tpu.dot_dimension_numbers<[1], [0], [0], [1], [0, 0, 1, 1], [], []>} : vector<8x32xbf16>, vector<32x32xbf16>, vector<8x32xf32> -> vector<8x32xf32>
    %c0_3 = arith.constant 0 : index
    %c0_4 = arith.constant 0 : index
    %3 = vector.load %arg6[%c0_3, %c0_4] : memref<1x32xf32, #tpu.memory_space<vmem>>, vector<1x32xf32>
    %4 = vector.broadcast %3 : vector<1x32xf32> to vector<8x32xf32>
    %5 = arith.addf %2, %4 : vector<8x32xf32>
    %c0_5 = arith.constant 0 : index
    %6 = memref.load %arg1[%c0_5] : memref<5xf32, #tpu.memory_space<smem>>
    %cst_6 = arith.constant 0.000000e+00 : f32
    %7 = vector.broadcast %cst_6 : f32 to vector<8x32xf32>
    %8 = arith.cmpf ogt, %5, %7 : vector<8x32xf32>
    %9 = vector.broadcast %6 : f32 to vector<8x32xf32>
    %10 = arith.mulf %9, %5 : vector<8x32xf32>
    %11 = arith.select %8, %5, %10 : vector<8x32xi1>, vector<8x32xf32>
    %12 = arith.truncf %11 : vector<8x32xf32> to vector<8x32xbf16>
    %c0_7 = arith.constant 0 : index
    %c0_8 = arith.constant 0 : index
    %13 = vector.load %arg7[%c0_7, %c0_8] : memref<32x32xbf16, #tpu.memory_space<vmem>>, vector<32x32xbf16>
    %cst_9 = arith.constant dense<0.000000e+00> : vector<8x32xf32>
    %14 = tpu.matmul %12, %13, %cst_9 {dimension_numbers = #tpu.dot_dimension_numbers<[1], [0], [0], [1], [0, 0, 1, 1], [], []>} : vector<8x32xbf16>, vector<32x32xbf16>, vector<8x32xf32> -> vector<8x32xf32>
    %c0_10 = arith.constant 0 : index
    %c0_11 = arith.constant 0 : index
    %15 = vector.load %arg8[%c0_10, %c0_11] : memref<1x32xf32, #tpu.memory_space<vmem>>, vector<1x32xf32>
    %16 = vector.broadcast %15 : vector<1x32xf32> to vector<8x32xf32>
    %17 = arith.addf %14, %16 : vector<8x32xf32>
    %c3 = arith.constant 3 : index
    %18 = memref.load %arg1[%c3] : memref<5xf32, #tpu.memory_space<smem>>
    %cst_12 = arith.constant 0.000000e+00 : f32
    %19 = vector.broadcast %cst_12 : f32 to vector<8x32xf32>
    %20 = arith.cmpf ogt, %17, %19 : vector<8x32xf32>
    %21 = vector.broadcast %18 : f32 to vector<8x32xf32>
    %22 = arith.mulf %21, %17 : vector<8x32xf32>
    %23 = arith.select %20, %17, %22 : vector<8x32xi1>, vector<8x32xf32>
    %24 = arith.truncf %23 : vector<8x32xf32> to vector<8x32xbf16>
    %c0_13 = arith.constant 0 : index
    %c0_14 = arith.constant 0 : index
    %25 = vector.load %arg17[%c0_13, %c0_14] : memref<32x32xbf16, #tpu.memory_space<vmem>>, vector<32x32xbf16>
    %cst_15 = arith.constant dense<0.000000e+00> : vector<8x32xf32>
    %26 = tpu.matmul %24, %25, %cst_15 {dimension_numbers = #tpu.dot_dimension_numbers<[1], [0], [0], [1], [0, 0, 1, 1], [], []>} : vector<8x32xbf16>, vector<32x32xbf16>, vector<8x32xf32> -> vector<8x32xf32>
    %c0_16 = arith.constant 0 : index
    %c0_17 = arith.constant 0 : index
    %27 = vector.load %arg3[%c0_16, %c0_17] : memref<8x32xbf16, #tpu.memory_space<vmem>>, vector<8x32xbf16>
    %c0_18 = arith.constant 0 : index
    %c0_19 = arith.constant 0 : index
    %28 = vector.load %arg9[%c0_18, %c0_19] : memref<32x32xbf16, #tpu.memory_space<vmem>>, vector<32x32xbf16>
    %cst_20 = arith.constant dense<0.000000e+00> : vector<8x32xf32>
    %29 = tpu.matmul %27, %28, %cst_20 {dimension_numbers = #tpu.dot_dimension_numbers<[1], [0], [0], [1], [0, 0, 1, 1], [], []>} : vector<8x32xbf16>, vector<32x32xbf16>, vector<8x32xf32> -> vector<8x32xf32>
    %c0_21 = arith.constant 0 : index
    %c0_22 = arith.constant 0 : index
    %30 = vector.load %arg10[%c0_21, %c0_22] : memref<1x32xf32, #tpu.memory_space<vmem>>, vector<1x32xf32>
    %31 = vector.broadcast %30 : vector<1x32xf32> to vector<8x32xf32>
    %32 = arith.addf %29, %31 : vector<8x32xf32>
    %c1 = arith.constant 1 : index
    %33 = memref.load %arg1[%c1] : memref<5xf32, #tpu.memory_space<smem>>
    %cst_23 = arith.constant 0.000000e+00 : f32
    %34 = vector.broadcast %cst_23 : f32 to vector<8x32xf32>
    %35 = arith.cmpf ogt, %32, %34 : vector<8x32xf32>
    %36 = vector.broadcast %33 : f32 to vector<8x32xf32>
    %37 = arith.mulf %36, %32 : vector<8x32xf32>
    %38 = arith.select %35, %32, %37 : vector<8x32xi1>, vector<8x32xf32>
    %39 = arith.truncf %38 : vector<8x32xf32> to vector<8x32xbf16>
    %c0_24 = arith.constant 0 : index
    %c0_25 = arith.constant 0 : index
    %40 = vector.load %arg11[%c0_24, %c0_25] : memref<32x32xbf16, #tpu.memory_space<vmem>>, vector<32x32xbf16>
    %cst_26 = arith.constant dense<0.000000e+00> : vector<8x32xf32>
    %41 = tpu.matmul %39, %40, %cst_26 {dimension_numbers = #tpu.dot_dimension_numbers<[1], [0], [0], [1], [0, 0, 1, 1], [], []>} : vector<8x32xbf16>, vector<32x32xbf16>, vector<8x32xf32> -> vector<8x32xf32>
    %c0_27 = arith.constant 0 : index
    %c0_28 = arith.constant 0 : index
    %42 = vector.load %arg12[%c0_27, %c0_28] : memref<1x32xf32, #tpu.memory_space<vmem>>, vector<1x32xf32>
    %43 = vector.broadcast %42 : vector<1x32xf32> to vector<8x32xf32>
    %44 = arith.addf %41, %43 : vector<8x32xf32>
    %c3_29 = arith.constant 3 : index
    %45 = memref.load %arg1[%c3_29] : memref<5xf32, #tpu.memory_space<smem>>
    %cst_30 = arith.constant 0.000000e+00 : f32
    %46 = vector.broadcast %cst_30 : f32 to vector<8x32xf32>
    %47 = arith.cmpf ogt, %44, %46 : vector<8x32xf32>
    %48 = vector.broadcast %45 : f32 to vector<8x32xf32>
    %49 = arith.mulf %48, %44 : vector<8x32xf32>
    %50 = arith.select %47, %44, %49 : vector<8x32xi1>, vector<8x32xf32>
    %51 = arith.truncf %50 : vector<8x32xf32> to vector<8x32xbf16>
    %c0_31 = arith.constant 0 : index
    %c0_32 = arith.constant 0 : index
    %52 = vector.load %arg18[%c0_31, %c0_32] : memref<32x32xbf16, #tpu.memory_space<vmem>>, vector<32x32xbf16>
    %cst_33 = arith.constant dense<0.000000e+00> : vector<8x32xf32>
    %53 = tpu.matmul %51, %52, %cst_33 {dimension_numbers = #tpu.dot_dimension_numbers<[1], [0], [0], [1], [0, 0, 1, 1], [], []>} : vector<8x32xbf16>, vector<32x32xbf16>, vector<8x32xf32> -> vector<8x32xf32>
    %54 = arith.addf %26, %53 : vector<8x32xf32>
    %c0_34 = arith.constant 0 : index
    %c0_35 = arith.constant 0 : index
    %55 = vector.load %arg4[%c0_34, %c0_35] : memref<8x32xbf16, #tpu.memory_space<vmem>>, vector<8x32xbf16>
    %c0_36 = arith.constant 0 : index
    %c0_37 = arith.constant 0 : index
    %56 = vector.load %arg13[%c0_36, %c0_37] : memref<32x32xbf16, #tpu.memory_space<vmem>>, vector<32x32xbf16>
    %cst_38 = arith.constant dense<0.000000e+00> : vector<8x32xf32>
    %57 = tpu.matmul %55, %56, %cst_38 {dimension_numbers = #tpu.dot_dimension_numbers<[1], [0], [0], [1], [0, 0, 1, 1], [], []>} : vector<8x32xbf16>, vector<32x32xbf16>, vector<8x32xf32> -> vector<8x32xf32>
    %c0_39 = arith.constant 0 : index
    %c0_40 = arith.constant 0 : index
    %58 = vector.load %arg14[%c0_39, %c0_40] : memref<1x32xf32, #tpu.memory_space<vmem>>, vector<1x32xf32>
    %59 = vector.broadcast %58 : vector<1x32xf32> to vector<8x32xf32>
    %60 = arith.addf %57, %59 : vector<8x32xf32>
    %c2 = arith.constant 2 : index
    %61 = memref.load %arg1[%c2] : memref<5xf32, #tpu.memory_space<smem>>
    %cst_41 = arith.constant 0.000000e+00 : f32
    %62 = vector.broadcast %cst_41 : f32 to vector<8x32xf32>
    %63 = arith.cmpf ogt, %60, %62 : vector<8x32xf32>
    %64 = vector.broadcast %61 : f32 to vector<8x32xf32>
    %65 = arith.mulf %64, %60 : vector<8x32xf32>
    %66 = arith.select %63, %60, %65 : vector<8x32xi1>, vector<8x32xf32>
    %67 = arith.truncf %66 : vector<8x32xf32> to vector<8x32xbf16>
    %c0_42 = arith.constant 0 : index
    %c0_43 = arith.constant 0 : index
    %68 = vector.load %arg15[%c0_42, %c0_43] : memref<32x32xbf16, #tpu.memory_space<vmem>>, vector<32x32xbf16>
    %cst_44 = arith.constant dense<0.000000e+00> : vector<8x32xf32>
    %69 = tpu.matmul %67, %68, %cst_44 {dimension_numbers = #tpu.dot_dimension_numbers<[1], [0], [0], [1], [0, 0, 1, 1], [], []>} : vector<8x32xbf16>, vector<32x32xbf16>, vector<8x32xf32> -> vector<8x32xf32>
    %c0_45 = arith.constant 0 : index
    %c0_46 = arith.constant 0 : index
    %70 = vector.load %arg16[%c0_45, %c0_46] : memref<1x32xf32, #tpu.memory_space<vmem>>, vector<1x32xf32>
    %71 = vector.broadcast %70 : vector<1x32xf32> to vector<8x32xf32>
    %72 = arith.addf %69, %71 : vector<8x32xf32>
    %c3_47 = arith.constant 3 : index
    %73 = memref.load %arg1[%c3_47] : memref<5xf32, #tpu.memory_space<smem>>
    %cst_48 = arith.constant 0.000000e+00 : f32
    %74 = vector.broadcast %cst_48 : f32 to vector<8x32xf32>
    %75 = arith.cmpf ogt, %72, %74 : vector<8x32xf32>
    %76 = vector.broadcast %73 : f32 to vector<8x32xf32>
    %77 = arith.mulf %76, %72 : vector<8x32xf32>
    %78 = arith.select %75, %72, %77 : vector<8x32xi1>, vector<8x32xf32>
    %79 = arith.truncf %78 : vector<8x32xf32> to vector<8x32xbf16>
    %c0_49 = arith.constant 0 : index
    %c0_50 = arith.constant 0 : index
    %80 = vector.load %arg19[%c0_49, %c0_50] : memref<32x32xbf16, #tpu.memory_space<vmem>>, vector<32x32xbf16>
    %cst_51 = arith.constant dense<0.000000e+00> : vector<8x32xf32>
    %81 = tpu.matmul %79, %80, %cst_51 {dimension_numbers = #tpu.dot_dimension_numbers<[1], [0], [0], [1], [0, 0, 1, 1], [], []>} : vector<8x32xbf16>, vector<32x32xbf16>, vector<8x32xf32> -> vector<8x32xf32>
    %82 = arith.addf %54, %81 : vector<8x32xf32>
    %c0_52 = arith.constant 0 : index
    %c0_53 = arith.constant 0 : index
    %83 = vector.load %arg20[%c0_52, %c0_53] : memref<1x32xf32, #tpu.memory_space<vmem>>, vector<1x32xf32>
    %84 = vector.broadcast %83 : vector<1x32xf32> to vector<8x32xf32>
    %85 = arith.addf %82, %84 : vector<8x32xf32>
    %c4 = arith.constant 4 : index
    %86 = memref.load %arg1[%c4] : memref<5xf32, #tpu.memory_space<smem>>
    %cst_54 = arith.constant 0.000000e+00 : f32
    %87 = vector.broadcast %cst_54 : f32 to vector<8x32xf32>
    %88 = arith.cmpf ogt, %85, %87 : vector<8x32xf32>
    %89 = vector.broadcast %86 : f32 to vector<8x32xf32>
    %90 = arith.mulf %89, %85 : vector<8x32xf32>
    %91 = arith.select %88, %85, %90 : vector<8x32xi1>, vector<8x32xf32>
    %92 = arith.truncf %91 : vector<8x32xf32> to vector<8x32xbf16>
    %c0_55 = arith.constant 0 : index
    %c0_56 = arith.constant 0 : index
    %93 = vector.load %arg21[%c0_55, %c0_56] : memref<32x128xbf16, #tpu.memory_space<vmem>>, vector<32x128xbf16>
    %cst_57 = arith.constant dense<0.000000e+00> : vector<8x128xf32>
    %94 = tpu.matmul %92, %93, %cst_57 {dimension_numbers = #tpu.dot_dimension_numbers<[1], [0], [0], [1], [0, 0, 1, 1], [], []>} : vector<8x32xbf16>, vector<32x128xbf16>, vector<8x128xf32> -> vector<8x128xf32>
    %c0_58 = arith.constant 0 : index
    %c0_59 = arith.constant 0 : index
    %95 = vector.load %arg22[%c0_58, %c0_59] : memref<1x128xf32, #tpu.memory_space<vmem>>, vector<1x128xf32>
    %96 = vector.broadcast %95 : vector<1x128xf32> to vector<8x128xf32>
    %97 = arith.addf %94, %96 : vector<8x128xf32>
    %98 = arith.truncf %97 : vector<8x128xf32> to vector<8x128xbf16>
    %c0_60 = arith.constant 0 : index
    %c0_61 = arith.constant 0 : index
    %99 = vector.load %arg23[%c0_60, %c0_61] : memref<8x128xbf16, #tpu.memory_space<vmem>>, vector<8x128xbf16>
    tpu.vector_store %arg23[%c0_60, %c0_61], %98 {strides = array<i32>} : memref<8x128xbf16, #tpu.memory_space<vmem>>, vector<8x128xbf16>,
    return
  }
  func.func @transform_0(%arg0: i32) -> i32 {
    %c0_i32 = arith.constant 0 : i32
    %c0_i32_0 = arith.constant 0 : i32
    return %c0_i32 : i32
  }
  func.func @transform_1(%arg0: i32) -> (i32, i32) {
    %c0_i32 = arith.constant 0 : i32
    %c0_i32_0 = arith.constant 0 : i32
    return %arg0, %c0_i32 : i32, i32
  }
  func.func @transform_2(%arg0: i32) -> (i32, i32) {
    %c0_i32 = arith.constant 0 : i32
    %c0_i32_0 = arith.constant 0 : i32
    return %arg0, %c0_i32 : i32, i32
  }
  func.func @transform_3(%arg0: i32) -> (i32, i32) {
    %c0_i32 = arith.constant 0 : i32
    %c0_i32_0 = arith.constant 0 : i32
    return %arg0, %c0_i32 : i32, i32
  }
  func.func @transform_4(%arg0: i32) -> (i32, i32) {
    %c0_i32 = arith.constant 0 : i32
    %c0_i32_0 = arith.constant 0 : i32
    %c0_i32_1 = arith.constant 0 : i32
    return %c0_i32, %c0_i32_0 : i32, i32
  }
  func.func @transform_5(%arg0: i32) -> (i32, i32) {
    %c0_i32 = arith.constant 0 : i32
    %c0_i32_0 = arith.constant 0 : i32
    %c0_i32_1 = arith.constant 0 : i32
    return %c0_i32, %c0_i32_0 : i32, i32
  }
  func.func @transform_6(%arg0: i32) -> (i32, i32) {
    %c0_i32 = arith.constant 0 : i32
    %c0_i32_0 = arith.constant 0 : i32
    %c0_i32_1 = arith.constant 0 : i32
    return %c0_i32, %c0_i32_0 : i32, i32
  }
  func.func @transform_7(%arg0: i32) -> (i32, i32) {
    %c0_i32 = arith.constant 0 : i32
    %c0_i32_0 = arith.constant 0 : i32
    %c0_i32_1 = arith.constant 0 : i32
    return %c0_i32, %c0_i32_0 : i32, i32
  }
  func.func @transform_8(%arg0: i32) -> (i32, i32) {
    %c0_i32 = arith.constant 0 : i32
    %c0_i32_0 = arith.constant 0 : i32
    %c0_i32_1 = arith.constant 0 : i32
    return %c0_i32, %c0_i32_0 : i32, i32
  }
  func.func @transform_9(%arg0: i32) -> (i32, i32) {
    %c0_i32 = arith.constant 0 : i32
    %c0_i32_0 = arith.constant 0 : i32
    %c0_i32_1 = arith.constant 0 : i32
    return %c0_i32, %c0_i32_0 : i32, i32
  }
  func.func @transform_10(%arg0: i32) -> (i32, i32) {
    %c0_i32 = arith.constant 0 : i32
    %c0_i32_0 = arith.constant 0 : i32
    %c0_i32_1 = arith.constant 0 : i32
    return %c0_i32, %c0_i32_0 : i32, i32
  }
  func.func @transform_11(%arg0: i32) -> (i32, i32) {
    %c0_i32 = arith.constant 0 : i32
    %c0_i32_0 = arith.constant 0 : i32
    %c0_i32_1 = arith.constant 0 : i32
    return %c0_i32, %c0_i32_0 : i32, i32
  }
  func.func @transform_12(%arg0: i32) -> (i32, i32) {
    %c0_i32 = arith.constant 0 : i32
    %c0_i32_0 = arith.constant 0 : i32
    %c0_i32_1 = arith.constant 0 : i32
    return %c0_i32, %c0_i32_0 : i32, i32
  }
  func.func @transform_13(%arg0: i32) -> (i32, i32) {
    %c0_i32 = arith.constant 0 : i32
    %c0_i32_0 = arith.constant 0 : i32
    %c0_i32_1 = arith.constant 0 : i32
    return %c0_i32, %c0_i32_0 : i32, i32
  }
  func.func @transform_14(%arg0: i32) -> (i32, i32) {
    %c0_i32 = arith.constant 0 : i32
    %c0_i32_0 = arith.constant 0 : i32
    %c0_i32_1 = arith.constant 0 : i32
    return %c0_i32, %c0_i32_0 : i32, i32
  }
  func.func @transform_15(%arg0: i32) -> (i32, i32) {
    %c0_i32 = arith.constant 0 : i32
    %c0_i32_0 = arith.constant 0 : i32
    %c0_i32_1 = arith.constant 0 : i32
    return %c0_i32, %c0_i32_0 : i32, i32
  }
  func.func @transform_16(%arg0: i32) -> (i32, i32) {
    %c0_i32 = arith.constant 0 : i32
    %c0_i32_0 = arith.constant 0 : i32
    %c0_i32_1 = arith.constant 0 : i32
    return %c0_i32, %c0_i32_0 : i32, i32
  }
  func.func @transform_17(%arg0: i32) -> (i32, i32) {
    %c0_i32 = arith.constant 0 : i32
    %c0_i32_0 = arith.constant 0 : i32
    %c0_i32_1 = arith.constant 0 : i32
    return %c0_i32, %c0_i32_0 : i32, i32
  }
  func.func @transform_18(%arg0: i32) -> (i32, i32) {
    %c0_i32 = arith.constant 0 : i32
    %c0_i32_0 = arith.constant 0 : i32
    %c0_i32_1 = arith.constant 0 : i32
    return %c0_i32, %c0_i32_0 : i32, i32
  }
  func.func @transform_19(%arg0: i32) -> (i32, i32) {
    %c0_i32 = arith.constant 0 : i32
    %c0_i32_0 = arith.constant 0 : i32
    %c0_i32_1 = arith.constant 0 : i32
    return %c0_i32, %c0_i32_0 : i32, i32
  }
  func.func @transform_20(%arg0: i32) -> (i32, i32) {
    %c0_i32 = arith.constant 0 : i32
    %c0_i32_0 = arith.constant 0 : i32
    %c0_i32_1 = arith.constant 0 : i32
    return %c0_i32, %c0_i32_0 : i32, i32
  }
  func.func @transform_21(%arg0: i32) -> (i32, i32) {
    %c0_i32 = arith.constant 0 : i32
    %c0_i32_0 = arith.constant 0 : i32
    %c0_i32_1 = arith.constant 0 : i32
    return %c0_i32, %c0_i32_0 : i32, i32
  }
  func.func @transform_22(%arg0: i32) -> (i32, i32) {
    %c0_i32 = arith.constant 0 : i32
    %c0_i32_0 = arith.constant 0 : i32
    return %arg0, %c0_i32 : i32, i32
  }
}

module attributes {stable_mosaic.version = 11 : i64} {
  func.func @_sign_kernel(%arg0: i32, %arg1: memref<5xf32, #tpu.memory_space<smem>>, %arg2: memref<8x32xbf16, #tpu.memory_space<vmem>>, %arg3: memref<8x32xbf16, #tpu.memory_space<vmem>>, %arg4: memref<8x32xbf16, #tpu.memory_space<vmem>>, %arg5: memref<32x32xbf16, #tpu.memory_space<vmem>>, %arg6: memref<1x32xf32, #tpu.memory_space<vmem>>, %arg7: memref<32x32xbf16, #tpu.memory_space<vmem>>, %arg8: memref<1x32xf32, #tpu.memory_space<vmem>>, %arg9: memref<32x32xbf16, #tpu.memory_space<vmem>>, %arg10: memref<1x32xf32, #tpu.memory_space<vmem>>, %arg11: memref<32x32xbf16, #tpu.memory_space<vmem>>, %arg12: memref<1x32xf32, #tpu.memory_space<vmem>>, %arg13: memref<32x32xbf16, #tpu.memory_space<vmem>>, %arg14: memref<1x32xf32, #tpu.memory_space<vmem>>, %arg15: memref<32x32xbf16, #tpu.memory_space<vmem>>, %arg16: memref<1x32xf32, #tpu.memory_space<vmem>>, %arg17: memref<32x32xbf16, #tpu.memory_space<vmem>>, %arg18: memref<32x32xbf16, #tpu.memory_space<vmem>>, %arg19: memref<32x32xbf16, #tpu.memory_space<vmem>>, %arg20: memref<1x32xf32, #tpu.memory_space<vmem>>, %arg21: memref<32x128xbf16, #tpu.memory_space<vmem>>, %arg22: memref<1x128xf32, #tpu.memory_space<vmem>>, %arg23: memref<8x128xbf16, #tpu.memory_space<vmem>>) attributes {dimension_semantics = [#tpu.dimension_semantics<parallel>], iteration_bounds = array<i64: 1>, scalar_prefetch = 0 : i64, scratch_operands = 0 : i64, tpu.core_type = #tpu.core_type<tc>, window_params = [{transform_indices = @transform_0, window_bounds = array<i64: 5>}, {transform_indices = @transform_1, window_bounds = array<i64: 8, 32>}, {transform_indices = @transform_2, window_bounds = array<i64: 8, 32>}, {transform_indices = @transform_3, window_bounds = array<i64: 8, 32>}, {pipeline_mode = #tpu.pipeline_mode<synchronous>, transform_indices = @transform_4, window_bounds = array<i64: 32, 32>}, {pipeline_mode = #tpu.pipeline_mode<synchronous>, transform_indices = @transform_5, window_bounds = array<i64: 1, 32>}, {pipeline_mode = #tpu.pipeline_mode<synchronous>, transform_indices = @transform_6, window_bounds = array<i64: 32, 32>}, {pipeline_mode = #tpu.pipeline_mode<synchronous>, transform_indices = @transform_7, window_bounds = array<i64: 1, 32>}, {pipeline_mode = #tpu.pipeline_mode<synchronous>, transform_indices = @transform_8, window_bounds = array<i64: 32, 32>}, {pipeline_mode = #tpu.pipeline_mode<synchronous>, transform_indices = @transform_9, window_bounds = array<i64: 1, 32>}, {pipeline_mode = #tpu.pipeline_mode<synchronous>, transform_indices = @transform_10, window_bounds = array<i64: 32, 32>}, {pipeline_mode = #tpu.pipeline_mode<synchronous>, transform_indices = @transform_11, window_bounds = array<i64: 1, 32>}, {pipeline_mode = #tpu.pipeline_mode<synchronous>, transform_indices = @transform_12, window_bounds = array<i64: 32, 32>}, {pipeline_mode = #tpu.pipeline_mode<synchronous>, transform_indices = @transform_13, window_bounds = array<i64: 1, 32>}, {pipeline_mode = #tpu.pipeline_mode<synchronous>, transform_indices = @transform_14, window_bounds = array<i64: 32, 32>}, {pipeline_mode = #tpu.pipeline_mode<synchronous>, transform_indices = @transform_15, window_bounds = array<i64: 1, 32>}, {pipeline_mode = #tpu.pipeline_mode<synchronous>, transform_indices = @transform_16, window_bounds = array<i64: 32, 32>}, {pipeline_mode = #tpu.pipeline_mode<synchronous>, transform_indices = @transform_17, window_bounds = array<i64: 32, 32>}, {pipeline_mode = #tpu.pipeline_mode<synchronous>, transform_indices = @transform_18, window_bounds = array<i64: 32, 32>}, {pipeline_mode = #tpu.pipeline_mode<synchronous>, transform_indices = @transform_19, window_bounds = array<i64: 1, 32>}, {pipeline_mode = #tpu.pipeline_mode<synchronous>, transform_indices = @transform_20, window_bounds = array<i64: 32, 128>}, {pipeline_mode = #tpu.pipeline_mode<synchronous>, transform_indices = @transform_21, window_bounds = array<i64: 1, 128>}, {transform_indices = @transform_22, window_bounds = array<i64: 8, 128>}]} {
    %c0 = arith.constant 0 : index
    %c0_0 = arith.constant 0 : index
    %0 = vector.load %arg2[%c0, %c0_0] : memref<8x32xbf16, #tpu.memory_space<vmem>>, vector<8x32xbf16>
    %c0_1 = arith.constant 0 : index
    %c0_2 = arith.constant 0 : index
    %1 = vector.load %arg5[%c0_1, %c0_2] : memref<32x32xbf16, #tpu.memory_space<vmem>>, vector<32x32xbf16>
    %cst = arith.constant dense<0.000000e+00> : vector<8x32xf32>
    %2 = tpu.matmul %0, %1, %cst {dimension_numbers = #tpu.dot_dimension_numbers<[1], [0], [0], [1], [0, 0, 1, 1], [], []>} : vector<8x32xbf16>, vector<32x32xbf16>, vector<8x32xf32> -> vector<8x32xf32>
    %c0_3 = arith.constant 0 : index
    %c0_4 = arith.constant 0 : index
    %3 = vector.load %arg6[%c0_3, %c0_4] : memref<1x32xf32, #tpu.memory_space<vmem>>, vector<1x32xf32>
    %4 = vector.broadcast %3 : vector<1x32xf32> to vector<8x32xf32>
    %5 = arith.addf %2, %4 : vector<8x32xf32>
    %c0_5 = arith.constant 0 : index
    %6 = memref.load %arg1[%c0_5] : memref<5xf32, #tpu.memory_space<smem>>
    %cst_6 = arith.constant 0.000000e+00 : f32
    %7 = vector.broadcast %cst_6 : f32 to vector<8x32xf32>
    %8 = arith.cmpf ogt, %5, %7 : vector<8x32xf32>
    %9 = vector.broadcast %6 : f32 to vector<8x32xf32>
    %10 = arith.mulf %9, %5 : vector<8x32xf32>
    %11 = arith.select %8, %5, %10 : vector<8x32xi1>, vector<8x32xf32>
    %12 = arith.truncf %11 : vector<8x32xf32> to vector<8x32xbf16>
    %c0_7 = arith.constant 0 : index
    %c0_8 = arith.constant 0 : index
    %13 = vector.load %arg7[%c0_7, %c0_8] : memref<32x32xbf16, #tpu.memory_space<vmem>>, vector<32x32xbf16>
    %cst_9 = arith.constant dense<0.000000e+00> : vector<8x32xf32>
    %14 = tpu.matmul %12, %13, %cst_9 {dimension_numbers = #tpu.dot_dimension_numbers<[1], [0], [0], [1], [0, 0, 1, 1], [], []>} : vector<8x32xbf16>, vector<32x32xbf16>, vector<8x32xf32> -> vector<8x32xf32>
    %c0_10 = arith.constant 0 : index
    %c0_11 = arith.constant 0 : index
    %15 = vector.load %arg8[%c0_10, %c0_11] : memref<1x32xf32, #tpu.memory_space<vmem>>, vector<1x32xf32>
    %16 = vector.broadcast %15 : vector<1x32xf32> to vector<8x32xf32>
    %17 = arith.addf %14, %16 : vector<8x32xf32>
    %c3 = arith.constant 3 : index
    %18 = memref.load %arg1[%c3] : memref<5xf32, #tpu.memory_space<smem>>
    %cst_12 = arith.constant 0.000000e+00 : f32
    %19 = vector.broadcast %cst_12 : f32 to vector<8x32xf32>
    %20 = arith.cmpf ogt, %17, %19 : vector<8x32xf32>
    %21 = vector.broadcast %18 : f32 to vector<8x32xf32>
    %22 = arith.mulf %21, %17 : vector<8x32xf32>
    %23 = arith.select %20, %17, %22 : vector<8x32xi1>, vector<8x32xf32>
    %24 = arith.truncf %23 : vector<8x32xf32> to vector<8x32xbf16>
    %c0_13 = arith.constant 0 : index
    %c0_14 = arith.constant 0 : index
    %25 = vector.load %arg17[%c0_13, %c0_14] : memref<32x32xbf16, #tpu.memory_space<vmem>>, vector<32x32xbf16>
    %cst_15 = arith.constant dense<0.000000e+00> : vector<8x32xf32>
    %26 = tpu.matmul %24, %25, %cst_15 {dimension_numbers = #tpu.dot_dimension_numbers<[1], [0], [0], [1], [0, 0, 1, 1], [], []>} : vector<8x32xbf16>, vector<32x32xbf16>, vector<8x32xf32> -> vector<8x32xf32>
    %c0_16 = arith.constant 0 : index
    %c0_17 = arith.constant 0 : index
    %27 = vector.load %arg3[%c0_16, %c0_17] : memref<8x32xbf16, #tpu.memory_space<vmem>>, vector<8x32xbf16>
    %c0_18 = arith.constant 0 : index
    %c0_19 = arith.constant 0 : index
    %28 = vector.load %arg9[%c0_18, %c0_19] : memref<32x32xbf16, #tpu.memory_space<vmem>>, vector<32x32xbf16>
    %cst_20 = arith.constant dense<0.000000e+00> : vector<8x32xf32>
    %29 = tpu.matmul %27, %28, %cst_20 {dimension_numbers = #tpu.dot_dimension_numbers<[1], [0], [0], [1], [0, 0, 1, 1], [], []>} : vector<8x32xbf16>, vector<32x32xbf16>, vector<8x32xf32> -> vector<8x32xf32>
    %c0_21 = arith.constant 0 : index
    %c0_22 = arith.constant 0 : index
    %30 = vector.load %arg10[%c0_21, %c0_22] : memref<1x32xf32, #tpu.memory_space<vmem>>, vector<1x32xf32>
    %31 = vector.broadcast %30 : vector<1x32xf32> to vector<8x32xf32>
    %32 = arith.addf %29, %31 : vector<8x32xf32>
    %c1 = arith.constant 1 : index
    %33 = memref.load %arg1[%c1] : memref<5xf32, #tpu.memory_space<smem>>
    %cst_23 = arith.constant 0.000000e+00 : f32
    %34 = vector.broadcast %cst_23 : f32 to vector<8x32xf32>
    %35 = arith.cmpf ogt, %32, %34 : vector<8x32xf32>
    %36 = vector.broadcast %33 : f32 to vector<8x32xf32>
    %37 = arith.mulf %36, %32 : vector<8x32xf32>
    %38 = arith.select %35, %32, %37 : vector<8x32xi1>, vector<8x32xf32>
    %39 = arith.truncf %38 : vector<8x32xf32> to vector<8x32xbf16>
    %c0_24 = arith.constant 0 : index
    %c0_25 = arith.constant 0 : index
    %40 = vector.load %arg11[%c0_24, %c0_25] : memref<32x32xbf16, #tpu.memory_space<vmem>>, vector<32x32xbf16>
    %cst_26 = arith.constant dense<0.000000e+00> : vector<8x32xf32>
    %41 = tpu.matmul %39, %40, %cst_26 {dimension_numbers = #tpu.dot_dimension_numbers<[1], [0], [0], [1], [0, 0, 1, 1], [], []>} : vector<8x32xbf16>, vector<32x32xbf16>, vector<8x32xf32> -> vector<8x32xf32>
    %c0_27 = arith.constant 0 : index
    %c0_28 = arith.constant 0 : index
    %42 = vector.load %arg12[%c0_27, %c0_28] : memref<1x32xf32, #tpu.memory_space<vmem>>, vector<1x32xf32>
    %43 = vector.broadcast %42 : vector<1x32xf32> to vector<8x32xf32>
    %44 = arith.addf %41, %43 : vector<8x32xf32>
    %c3_29 = arith.constant 3 : index
    %45 = memref.load %arg1[%c3_29] : memref<5xf32, #tpu.memory_space<smem>>
    %cst_30 = arith.constant 0.000000e+00 : f32
    %46 = vector.broadcast %cst_30 : f32 to vector<8x32xf32>
    %47 = arith.cmpf ogt, %44, %46 : vector<8x32xf32>
    %48 = vector.broadcast %45 : f32 to vector<8x32xf32>
    %49 = arith.mulf %48, %44 : vector<8x32xf32>
    %50 = arith.select %47, %44, %49 : vector<8x32xi1>, vector<8x32xf32>
    %51 = arith.truncf %50 : vector<8x32xf32> to vector<8x32xbf16>
    %c0_31 = arith.constant 0 : index
    %c0_32 = arith.constant 0 : index
    %52 = vector.load %arg18[%c0_31, %c0_32] : memref<32x32xbf16, #tpu.memory_space<vmem>>, vector<32x32xbf16>
    %cst_33 = arith.constant dense<0.000000e+00> : vector<8x32xf32>
    %53 = tpu.matmul %51, %52, %cst_33 {dimension_numbers = #tpu.dot_dimension_numbers<[1], [0], [0], [1], [0, 0, 1, 1], [], []>} : vector<8x32xbf16>, vector<32x32xbf16>, vector<8x32xf32> -> vector<8x32xf32>
    %54 = arith.addf %26, %53 : vector<8x32xf32>
    %c0_34 = arith.constant 0 : index
    %c0_35 = arith.constant 0 : index
    %55 = vector.load %arg4[%c0_34, %c0_35] : memref<8x32xbf16, #tpu.memory_space<vmem>>, vector<8x32xbf16>
    %c0_36 = arith.constant 0 : index
    %c0_37 = arith.constant 0 : index
    %56 = vector.load %arg13[%c0_36, %c0_37] : memref<32x32xbf16, #tpu.memory_space<vmem>>, vector<32x32xbf16>
    %cst_38 = arith.constant dense<0.000000e+00> : vector<8x32xf32>
    %57 = tpu.matmul %55, %56, %cst_38 {dimension_numbers = #tpu.dot_dimension_numbers<[1], [0], [0], [1], [0, 0, 1, 1], [], []>} : vector<8x32xbf16>, vector<32x32xbf16>, vector<8x32xf32> -> vector<8x32xf32>
    %c0_39 = arith.constant 0 : index
    %c0_40 = arith.constant 0 : index
    %58 = vector.load %arg14[%c0_39, %c0_40] : memref<1x32xf32, #tpu.memory_space<vmem>>, vector<1x32xf32>
    %59 = vector.broadcast %58 : vector<1x32xf32> to vector<8x32xf32>
    %60 = arith.addf %57, %59 : vector<8x32xf32>
    %c2 = arith.constant 2 : index
    %61 = memref.load %arg1[%c2] : memref<5xf32, #tpu.memory_space<smem>>
    %cst_41 = arith.constant 0.000000e+00 : f32
    %62 = vector.broadcast %cst_41 : f32 to vector<8x32xf32>
    %63 = arith.cmpf ogt, %60, %62 : vector<8x32xf32>
    %64 = vector.broadcast %61 : f32 to vector<8x32xf32>
    %65 = arith.mulf %64, %60 : vector<8x32xf32>
    %66 = arith.select %63, %60, %65 : vector<8x32xi1>, vector<8x32xf32>
    %67 = arith.truncf %66 : vector<8x32xf32> to vector<8x32xbf16>
    %c0_42 = arith.constant 0 : index
    %c0_43 = arith.constant 0 : index
    %68 = vector.load %arg15[%c0_42, %c0_43] : memref<32x32xbf16, #tpu.memory_space<vmem>>, vector<32x32xbf16>
    %cst_44 = arith.constant dense<0.000000e+00> : vector<8x32xf32>
    %69 = tpu.matmul %67, %68, %cst_44 {dimension_numbers = #tpu.dot_dimension_numbers<[1], [0], [0], [1], [0, 0, 1, 1], [], []>} : vector<8x32xbf16>, vector<32x32xbf16>, vector<8x32xf32> -> vector<8x32xf32>
    %c0_45 = arith.constant 0 : index
    %c0_46 = arith.constant 0 : index
    %70 = vector.load %arg16[%c0_45, %c0_46] : memref<1x32xf32, #tpu.memory_space<vmem>>, vector<1x32xf32>
    %71 = vector.broadcast %70 : vector<1x32xf32> to vector<8x32xf32>
    %72 = arith.addf %69, %71 : vector<8x32xf32>
    %c3_47 = arith.constant 3 : index
    %73 = memref.load %arg1[%c3_47] : memref<5xf32, #tpu.memory_space<smem>>
    %cst_48 = arith.constant 0.000000e+00 : f32
    %74 = vector.broadcast %cst_48 : f32 to vector<8x32xf32>
    %75 = arith.cmpf ogt, %72, %74 : vector<8x32xf32>
    %76 = vector.broadcast %73 : f32 to vector<8x32xf32>
    %77 = arith.mulf %76, %72 : vector<8x32xf32>
    %78 = arith.select %75, %72, %77 : vector<8x32xi1>, vector<8x32xf32>
    %79 = arith.truncf %78 : vector<8x32xf32> to vector<8x32xbf16>
    %c0_49 = arith.constant 0 : index
    %c0_50 = arith.constant 0 : index
    %80 = vector.load %arg19[%c0_49, %c0_50] : memref<32x32xbf16, #tpu.memory_space<vmem>>, vector<32x32xbf16>
    %cst_51 = arith.constant dense<0.000000e+00> : vector<8x32xf32>
    %81 = tpu.matmul %79, %80, %cst_51 {dimension_numbers = #tpu.dot_dimension_numbers<[1], [0], [0], [1], [0, 0, 1, 1], [], []>} : vector<8x32xbf16>, vector<32x32xbf16>, vector<8x32xf32> -> vector<8x32xf32>
    %82 = arith.addf %54, %81 : vector<8x32xf32>
    %c0_52 = arith.constant 0 : index
    %c0_53 = arith.constant 0 : index
    %83 = vector.load %arg20[%c0_52, %c0_53] : memref<1x32xf32, #tpu.memory_space<vmem>>, vector<1x32xf32>
    %84 = vector.broadcast %83 : vector<1x32xf32> to vector<8x32xf32>
    %85 = arith.addf %82, %84 : vector<8x32xf32>
    %c4 = arith.constant 4 : index
    %86 = memref.load %arg1[%c4] : memref<5xf32, #tpu.memory_space<smem>>
    %cst_54 = arith.constant 0.000000e+00 : f32
    %87 = vector.broadcast %cst_54 : f32 to vector<8x32xf32>
    %88 = arith.cmpf ogt, %85, %87 : vector<8x32xf32>
    %89 = vector.broadcast %86 : f32 to vector<8x32xf32>
    %90 = arith.mulf %89, %85 : vector<8x32xf32>
    %91 = arith.select %88, %85, %90 : vector<8x32xi1>, vector<8x32xf32>
    %92 = arith.truncf %91 : vector<8x32xf32> to vector<8x32xbf16>
    %c0_55 = arith.constant 0 : index
    %c0_56 = arith.constant 0 : index
    %93 = vector.load %arg21[%c0_55, %c0_56] : memref<32x128xbf16, #tpu.memory_space<vmem>>, vector<32x128xbf16>
    %cst_57 = arith.constant dense<0.000000e+00> : vector<8x128xf32>
    %94 = tpu.matmul %92, %93, %cst_57 {dimension_numbers = #tpu.dot_dimension_numbers<[1], [0], [0], [1], [0, 0, 1, 1], [], []>} : vector<8x32xbf16>, vector<32x128xbf16>, vector<8x128xf32> -> vector<8x128xf32>
    %c0_58 = arith.constant 0 : index
    %c0_59 = arith.constant 0 : index
    %95 = vector.load %arg22[%c0_58, %c0_59] : memref<1x128xf32, #tpu.memory_space<vmem>>, vector<1x128xf32>
    %96 = vector.broadcast %95 : vector<1x128xf32> to vector<8x128xf32>
    %97 = arith.addf %94, %96 : vector<8x128xf32>
    %98 = arith.truncf %97 : vector<8x128xf32> to vector<8x128xbf16>
    %c0_60 = arith.constant 0 : index
    %c0_61 = arith.constant 0 : index
    %99 = vector.load %arg23[%c0_60, %c0_61] : memref<8x128xbf16, #tpu.memory_space<vmem>>, vector<8x128xbf16>
    tpu.vector_store %arg23[%c0_60, %c0_61], %98 {strides = array<i32>} : memref<8x128xbf16, #tpu.memory_space<vmem>>, vector<8x128xbf16>,
    return
  }
  func.func @transform_0(%arg0: i32) -> i32 {
    %c0_i32 = arith.constant 0 : i32
    %c0_i32_0 = arith.constant 0 : i32
    return %c0_i32 : i32
  }
  func.func @transform_1(%arg0: i32) -> (i32, i32) {
    %c0_i32 = arith.constant 0 : i32
    %c0_i32_0 = arith.constant 0 : i32
    return %arg0, %c0_i32 : i32, i32
  }
  func.func @transform_2(%arg0: i32) -> (i32, i32) {
    %c0_i32 = arith.constant 0 : i32
    %c0_i32_0 = arith.constant 0 : i32
    return %arg0, %c0_i32 : i32, i32
  }
  func.func @transform_3(%arg0: i32) -> (i32, i32) {
    %c0_i32 = arith.constant 0 : i32
    %c0_i32_0 = arith.constant 0 : i32
    return %arg0, %c0_i32 : i32, i32
  }
  func.func @transform_4(%arg0: i32) -> (i32, i32) {
    %c0_i32 = arith.constant 0 : i32
    %c0_i32_0 = arith.constant 0 : i32
    %c0_i32_1 = arith.constant 0 : i32
    return %c0_i32, %c0_i32_0 : i32, i32
  }
  func.func @transform_5(%arg0: i32) -> (i32, i32) {
    %c0_i32 = arith.constant 0 : i32
    %c0_i32_0 = arith.constant 0 : i32
    %c0_i32_1 = arith.constant 0 : i32
    return %c0_i32, %c0_i32_0 : i32, i32
  }
  func.func @transform_6(%arg0: i32) -> (i32, i32) {
    %c0_i32 = arith.constant 0 : i32
    %c0_i32_0 = arith.constant 0 : i32
    %c0_i32_1 = arith.constant 0 : i32
    return %c0_i32, %c0_i32_0 : i32, i32
  }
  func.func @transform_7(%arg0: i32) -> (i32, i32) {
    %c0_i32 = arith.constant 0 : i32
    %c0_i32_0 = arith.constant 0 : i32
    %c0_i32_1 = arith.constant 0 : i32
    return %c0_i32, %c0_i32_0 : i32, i32
  }
  func.func @transform_8(%arg0: i32) -> (i32, i32) {
    %c0_i32 = arith.constant 0 : i32
    %c0_i32_0 = arith.constant 0 : i32
    %c0_i32_1 = arith.constant 0 : i32
    return %c0_i32, %c0_i32_0 : i32, i32
  }
  func.func @transform_9(%arg0: i32) -> (i32, i32) {
    %c0_i32 = arith.constant 0 : i32
    %c0_i32_0 = arith.constant 0 : i32
    %c0_i32_1 = arith.constant 0 : i32
    return %c0_i32, %c0_i32_0 : i32, i32
  }
  func.func @transform_10(%arg0: i32) -> (i32, i32) {
    %c0_i32 = arith.constant 0 : i32
    %c0_i32_0 = arith.constant 0 : i32
    %c0_i32_1 = arith.constant 0 : i32
    return %c0_i32, %c0_i32_0 : i32, i32
  }
  func.func @transform_11(%arg0: i32) -> (i32, i32) {
    %c0_i32 = arith.constant 0 : i32
    %c0_i32_0 = arith.constant 0 : i32
    %c0_i32_1 = arith.constant 0 : i32
    return %c0_i32, %c0_i32_0 : i32, i32
  }
  func.func @transform_12(%arg0: i32) -> (i32, i32) {
    %c0_i32 = arith.constant 0 : i32
    %c0_i32_0 = arith.constant 0 : i32
    %c0_i32_1 = arith.constant 0 : i32
    return %c0_i32, %c0_i32_0 : i32, i32
  }
  func.func @transform_13(%arg0: i32) -> (i32, i32) {
    %c0_i32 = arith.constant 0 : i32
    %c0_i32_0 = arith.constant 0 : i32
    %c0_i32_1 = arith.constant 0 : i32
    return %c0_i32, %c0_i32_0 : i32, i32
  }
  func.func @transform_14(%arg0: i32) -> (i32, i32) {
    %c0_i32 = arith.constant 0 : i32
    %c0_i32_0 = arith.constant 0 : i32
    %c0_i32_1 = arith.constant 0 : i32
    return %c0_i32, %c0_i32_0 : i32, i32
  }
  func.func @transform_15(%arg0: i32) -> (i32, i32) {
    %c0_i32 = arith.constant 0 : i32
    %c0_i32_0 = arith.constant 0 : i32
    %c0_i32_1 = arith.constant 0 : i32
    return %c0_i32, %c0_i32_0 : i32, i32
  }
  func.func @transform_16(%arg0: i32) -> (i32, i32) {
    %c0_i32 = arith.constant 0 : i32
    %c0_i32_0 = arith.constant 0 : i32
    %c0_i32_1 = arith.constant 0 : i32
    return %c0_i32, %c0_i32_0 : i32, i32
  }
  func.func @transform_17(%arg0: i32) -> (i32, i32) {
    %c0_i32 = arith.constant 0 : i32
    %c0_i32_0 = arith.constant 0 : i32
    %c0_i32_1 = arith.constant 0 : i32
    return %c0_i32, %c0_i32_0 : i32, i32
  }
  func.func @transform_18(%arg0: i32) -> (i32, i32) {
    %c0_i32 = arith.constant 0 : i32
    %c0_i32_0 = arith.constant 0 : i32
    %c0_i32_1 = arith.constant 0 : i32
    return %c0_i32, %c0_i32_0 : i32, i32
  }
  func.func @transform_19(%arg0: i32) -> (i32, i32) {
    %c0_i32 = arith.constant 0 : i32
    %c0_i32_0 = arith.constant 0 : i32
    %c0_i32_1 = arith.constant 0 : i32
    return %c0_i32, %c0_i32_0 : i32, i32
  }
  func.func @transform_20(%arg0: i32) -> (i32, i32) {
    %c0_i32 = arith.constant 0 : i32
    %c0_i32_0 = arith.constant 0 : i32
    %c0_i32_1 = arith.constant 0 : i32
    return %c0_i32, %c0_i32_0 : i32, i32
  }
  func.func @transform_21(%arg0: i32) -> (i32, i32) {
    %c0_i32 = arith.constant 0 : i32
    %c0_i32_0 = arith.constant 0 : i32
    %c0_i32_1 = arith.constant 0 : i32
    return %c0_i32, %c0_i32_0 : i32, i32
  }
  func.func @transform_22(%arg0: i32) -> (i32, i32) {
    %c0_i32 = arith.constant 0 : i32
    %c0_i32_0 = arith.constant 0 : i32
    return %arg0, %c0_i32 : i32, i32
  }
}

</mosaic_0001>

<llo_original>
// kernel: tpu_custom_call.1
$region0: #{tpu_custom_call.1}
  #allocation0 [shape = 'u32[]', space=smem, size = 0x4, offset = 0x4, fixed_abs, tag = 'smem constant byte address 0x4 - core index']
  #allocation1 [shape = 'u32[144,128]{1,0:T(1,128)}', space=vmem, size = 0x12000, scoped, tag = 'internal scratch']
  %s0 = inlined_call_operand.hbm [shape: f32[5], index: 0, kind: input, shape index: {}]
  %s1 = inlined_call_operand.hbm [shape: bf16[8,32], index: 1, kind: input, shape index: {}]
  %s2 = inlined_call_operand.hbm [shape: bf16[8,32], index: 2, kind: input, shape index: {}]
  %s3 = inlined_call_operand.hbm [shape: bf16[8,32], index: 3, kind: input, shape index: {}]
  %s4 = inlined_call_operand.hbm [shape: bf16[32,32], index: 4, kind: input, shape index: {}]
  %s5 = inlined_call_operand.hbm [shape: f32[1,32], index: 5, kind: input, shape index: {}]
  %s6 = inlined_call_operand.vmem [shape: bf16[32,32], index: 6, kind: input, shape index: {}]
  %s7 = inlined_call_operand.hbm [shape: f32[1,32], index: 7, kind: input, shape index: {}]
  %s8 = inlined_call_operand.hbm [shape: bf16[32,32], index: 8, kind: input, shape index: {}]
  %s9 = inlined_call_operand.hbm [shape: f32[1,32], index: 9, kind: input, shape index: {}]
  %s10 = inlined_call_operand.vmem [shape: bf16[32,32], index: 10, kind: input, shape index: {}]
  %s11 = inlined_call_operand.hbm [shape: f32[1,32], index: 11, kind: input, shape index: {}]
  %s12 = inlined_call_operand.hbm [shape: bf16[32,32], index: 12, kind: input, shape index: {}]
  %s13 = inlined_call_operand.hbm [shape: f32[1,32], index: 13, kind: input, shape index: {}]
  %s14 = inlined_call_operand.vmem [shape: bf16[32,32], index: 14, kind: input, shape index: {}]
  %s15 = inlined_call_operand.hbm [shape: f32[1,32], index: 15, kind: input, shape index: {}]
  %s16 = inlined_call_operand.hbm [shape: bf16[32,32], index: 16, kind: input, shape index: {}]
  %s17 = inlined_call_operand.vmem [shape: bf16[32,32], index: 17, kind: input, shape index: {}]
  %s18 = inlined_call_operand.hbm [shape: bf16[32,32], index: 18, kind: input, shape index: {}]
  %s19 = inlined_call_operand.vmem [shape: f32[1,32], index: 19, kind: input, shape index: {}]
  %s20 = inlined_call_operand.hbm [shape: bf16[32,128], index: 20, kind: input, shape index: {}]
  %s21 = inlined_call_operand.vmem [shape: f32[1,128], index: 21, kind: input, shape index: {}]
  %s22 = inlined_call_operand.hbm [shape: bf16[8,128], index: 22, kind: output, shape index: {}]
  %s23 = sld [smem:[#allocation0]]
  $region162: #{tpu_custom_call.1} parent=0
    _
  %s25 = ssub.s32 1, %s23
  %s26 = scalar_select 0, %s25, %s23
  $region1: #{tpu_custom_call.1} parent=0
    #allocation2 [shape = 'u8[512]{0}', space=smem, size = 0x200, scoped, tag = 'input window, operand 0, single buffered']
    #allocation3 [shape = 's32[1]{0}', space=sflag, size = 0x4, scoped, tag = 'scoped memory for tpu_custom_call.1']
    #allocation4 [shape = 's32[1]{0}', space=sflag, size = 0x4, scoped, tag = 'scoped memory for tpu_custom_call.1']
    #allocation5 [shape = 's32[1]{0}', space=sflag, size = 0x4, scoped, tag = 'scoped memory for tpu_custom_call.1']
    #allocation6 [shape = 'u8[2048]{0}', space=vmem, size = 0x800, scoped, tag = 'input window, operand 1, single buffered']
    #allocation7 [shape = 'u8[2048]{0}', space=vmem, size = 0x800, scoped, tag = 'input window, operand 2, single buffered']
    #allocation8 [shape = 's32[1]{0}', space=sflag, size = 0x4, scoped, tag = 'scoped memory for tpu_custom_call.1']
    #allocation9 [shape = 'u8[2048]{0}', space=vmem, size = 0x800, scoped, tag = 'input window, operand 3, single buffered']
    #allocation10 [shape = 'u8[8192]{0}', space=vmem, size = 0x2000, scoped, tag = 'input window, operand 4, single buffered']
    #allocation11 [shape = 's32[1]{0}', space=sflag, size = 0x4, scoped, tag = 'scoped memory for tpu_custom_call.1']
    #allocation12 [shape = 'u8[512]{0}', space=vmem, size = 0x400, scoped, tag = 'input window, operand 5, single buffered']
    #allocation13 [shape = 'u8[512]{0}', space=vmem, size = 0x400, scoped, tag = 'input window, operand 7, single buffered']
    #allocation14 [shape = 's32[1]{0}', space=sflag, size = 0x4, scoped, tag = 'scoped memory for tpu_custom_call.1']
    #allocation15 [shape = 'u8[8192]{0}', space=vmem, size = 0x2000, scoped, tag = 'input window, operand 8, single buffered']
    #allocation16 [shape = 'u8[512]{0}', space=vmem, size = 0x400, scoped, tag = 'input window, operand 9, single buffered']
    #allocation17 [shape = 's32[1]{0}', space=sflag, size = 0x4, scoped, tag = 'scoped memory for tpu_custom_call.1']
    #allocation18 [shape = 'u8[512]{0}', space=vmem, size = 0x400, scoped, tag = 'input window, operand 11, single buffered']
    #allocation19 [shape = 'u8[8192]{0}', space=vmem, size = 0x2000, scoped, tag = 'input window, operand 12, single buffered']
    #allocation20 [shape = 's32[1]{0}', space=sflag, size = 0x4, scoped, tag = 'scoped memory for tpu_custom_call.1']
    #allocation21 [shape = 'u8[512]{0}', space=vmem, size = 0x400, scoped, tag = 'input window, operand 13, single buffered']
    #allocation22 [shape = 'u8[512]{0}', space=vmem, size = 0x400, scoped, tag = 'input window, operand 15, single buffered']
    #allocation23 [shape = 's32[1]{0}', space=sflag, size = 0x4, scoped, tag = 'scoped memory for tpu_custom_call.1']
    #allocation24 [shape = 'u8[8192]{0}', space=vmem, size = 0x2000, scoped, tag = 'input window, operand 16, single buffered']
    #allocation25 [shape = 'u8[8192]{0}', space=vmem, size = 0x2000, scoped, tag = 'input window, operand 18, single buffered']
    #allocation26 [shape = 's32[1]{0}', space=sflag, size = 0x4, scoped, tag = 'scoped memory for tpu_custom_call.1']
    #allocation27 [shape = 'u8[8192]{0}', space=vmem, size = 0x2000, scoped, tag = 'input window, operand 20, single buffered']
    #allocation28 [shape = 'u8[2048]{0}', space=vmem, size = 0x800, scoped, tag = 'output window, operand 0, single buffered']
    %27 = vsyncpa [#allocation5], 0
    %28 = vsyncpa [#allocation3], 0
    %29 = vsyncpa [#allocation8], 0
    %30 = vsyncpa [#allocation11], 0
    %31 = vsyncpa [#allocation14], 0
    %32 = vsyncpa [#allocation17], 0
    %33 = vsyncpa [#allocation20], 0
    %34 = vsyncpa [#allocation23], 0
    %35 = vsyncpa [#allocation26], 0
    %36 = vsyncpa [#allocation4], 0
    // Predicated region
    $region2: #{tpu_custom_call.1} parent=1 // pred_check
      _
    $region3: #{tpu_custom_call.1} parent=1 // pred_check_branch
      %38 = sbr.rel (0) target = $region5
    $region4: #{tpu_custom_call.1} parent=1 // pred_region
      %s40 = ssub.s32 16, 16
      %41 = vsyncadd [#allocation5], %s40
      %44 = dma.hbm_to_smem %s0, 16, [#allocation2], [#allocation5]
    $region5: #{tpu_custom_call.1} parent=1 // pred_fallthru
      _
    // Predicated region
    $region6: #{tpu_custom_call.1} parent=1 // pred_check
      _
    $region7: #{tpu_custom_call.1} parent=1 // pred_check_branch
      %46 = sbr.rel (0) target = $region9
    $region8: #{tpu_custom_call.1} parent=1 // pred_region
      %s48 = ssub.s32 64, 64
      %49 = vsyncadd [#allocation3], %s48
      %s51 = sshll.u32 [#allocation6], 4
      %s52 = int_to_ptr.vmem [resolvable:$true] %s51
      %54 = dma.hbm_to_vmem [thread:$0]  %s1, 64, %s52, [#allocation3]
    $region9: #{tpu_custom_call.1} parent=1 // pred_fallthru
      _
    // Predicated region
    $region10: #{tpu_custom_call.1} parent=1 // pred_check
      _
    $region11: #{tpu_custom_call.1} parent=1 // pred_check_branch
      %56 = sbr.rel (0) target = $region13
    $region12: #{tpu_custom_call.1} parent=1 // pred_region
      %s58 = ssub.s32 64, 64
      %59 = vsyncadd [#allocation8], %s58
      %s61 = sshll.u32 [#allocation7], 4
      %s62 = int_to_ptr.vmem [resolvable:$true] %s61
      %64 = dma.hbm_to_vmem [thread:$0]  %s2, 64, %s62, [#allocation8]
    $region13: #{tpu_custom_call.1} parent=1 // pred_fallthru
      _
    // Predicated region
    $region14: #{tpu_custom_call.1} parent=1 // pred_check
      _
    $region15: #{tpu_custom_call.1} parent=1 // pred_check_branch
      %66 = sbr.rel (0) target = $region17
    $region16: #{tpu_custom_call.1} parent=1 // pred_region
      %s68 = ssub.s32 64, 64
      %69 = vsyncadd [#allocation8], %s68
      %s71 = sshll.u32 [#allocation9], 4
      %s72 = int_to_ptr.vmem [resolvable:$true] %s71
      %74 = dma.hbm_to_vmem [thread:$0]  %s3, 64, %s72, [#allocation8]
    $region17: #{tpu_custom_call.1} parent=1 // pred_fallthru
      _
    // Predicated region
    $region18: #{tpu_custom_call.1} parent=1 // pred_check
      _
    $region19: #{tpu_custom_call.1} parent=1 // pred_check_branch
      %76 = sbr.rel (0) target = $region21
    $region20: #{tpu_custom_call.1} parent=1 // pred_region
      %s78 = ssub.s32 256, 256
      %79 = vsyncadd [#allocation11], %s78
      %s80 = sshll.u32 [#allocation10], 4
      %s81 = int_to_ptr.vmem [resolvable:$true] %s80
      %86 = dma.hbm_to_vmem [thread:$0]  %s4, 256, %s81, [#allocation11], 64, 64, 4
    $region21: #{tpu_custom_call.1} parent=1 // pred_fallthru
      _
    // Predicated region
    $region22: #{tpu_custom_call.1} parent=1 // pred_check
      _
    $region23: #{tpu_custom_call.1} parent=1 // pred_check_branch
      %88 = sbr.rel (0) target = $region25
    $region24: #{tpu_custom_call.1} parent=1 // pred_region
      %s90 = ssub.s32 16, 16
      %91 = vsyncadd [#allocation11], %s90
      %s93 = sshll.u32 [#allocation12], 4
      %s94 = int_to_ptr.vmem [resolvable:$true] %s93
      %96 = dma.hbm_to_vmem [thread:$0]  %s5, 16, %s94, [#allocation11]
    $region25: #{tpu_custom_call.1} parent=1 // pred_fallthru
      _
    // Predicated region
    $region26: #{tpu_custom_call.1} parent=1 // pred_check
      _
    $region27: #{tpu_custom_call.1} parent=1 // pred_check_branch
      %98 = sbr.rel (0) target = $region29
    $region28: #{tpu_custom_call.1} parent=1 // pred_region
      _
    $region29: #{tpu_custom_call.1} parent=1 // pred_fallthru
      _
    // Predicated region
    $region30: #{tpu_custom_call.1} parent=1 // pred_check
      _
    $region31: #{tpu_custom_call.1} parent=1 // pred_check_branch
      %100 = sbr.rel (0) target = $region33
    $region32: #{tpu_custom_call.1} parent=1 // pred_region
      %s102 = ssub.s32 16, 16
      %103 = vsyncadd [#allocation14], %s102
      %s105 = sshll.u32 [#allocation13], 4
      %s106 = int_to_ptr.vmem [resolvable:$true] %s105
      %108 = dma.hbm_to_vmem [thread:$0]  %s7, 16, %s106, [#allocation14]
    $region33: #{tpu_custom_call.1} parent=1 // pred_fallthru
      _
    // Predicated region
    $region34: #{tpu_custom_call.1} parent=1 // pred_check
      _
    $region35: #{tpu_custom_call.1} parent=1 // pred_check_branch
      %110 = sbr.rel (0) target = $region37
    $region36: #{tpu_custom_call.1} parent=1 // pred_region
      %s112 = ssub.s32 256, 256
      %113 = vsyncadd [#allocation14], %s112
      %s114 = sshll.u32 [#allocation15], 4
      %s115 = int_to_ptr.vmem [resolvable:$true] %s114
      %120 = dma.hbm_to_vmem [thread:$0]  %s8, 256, %s115, [#allocation14], 64, 64, 4
    $region37: #{tpu_custom_call.1} parent=1 // pred_fallthru
      _
    // Predicated region
    $region38: #{tpu_custom_call.1} parent=1 // pred_check
      _
    $region39: #{tpu_custom_call.1} parent=1 // pred_check_branch
      %122 = sbr.rel (0) target = $region41
    $region40: #{tpu_custom_call.1} parent=1 // pred_region
      %s124 = ssub.s32 16, 16
      %125 = vsyncadd [#allocation17], %s124
      %s127 = sshll.u32 [#allocation16], 4
      %s128 = int_to_ptr.vmem [resolvable:$true] %s127
      %130 = dma.hbm_to_vmem [thread:$0]  %s9, 16, %s128, [#allocation17]
    $region41: #{tpu_custom_call.1} parent=1 // pred_fallthru
      _
    // Predicated region
    $region42: #{tpu_custom_call.1} parent=1 // pred_check
      _
    $region43: #{tpu_custom_call.1} parent=1 // pred_check_branch
      %132 = sbr.rel (0) target = $region45
    $region44: #{tpu_custom_call.1} parent=1 // pred_region
      _
    $region45: #{tpu_custom_call.1} parent=1 // pred_fallthru
      _
    // Predicated region
    $region46: #{tpu_custom_call.1} parent=1 // pred_check
      _
    $region47: #{tpu_custom_call.1} parent=1 // pred_check_branch
      %134 = sbr.rel (0) target = $region49
    $region48: #{tpu_custom_call.1} parent=1 // pred_region
      %s136 = ssub.s32 16, 16
      %137 = vsyncadd [#allocation17], %s136
      %s139 = sshll.u32 [#allocation18], 4
      %s140 = int_to_ptr.vmem [resolvable:$true] %s139
      %142 = dma.hbm_to_vmem [thread:$0]  %s11, 16, %s140, [#allocation17]
    $region49: #{tpu_custom_call.1} parent=1 // pred_fallthru
      _
    // Predicated region
    $region50: #{tpu_custom_call.1} parent=1 // pred_check
      _
    $region51: #{tpu_custom_call.1} parent=1 // pred_check_branch
      %144 = sbr.rel (0) target = $region53
    $region52: #{tpu_custom_call.1} parent=1 // pred_region
      %s146 = ssub.s32 256, 256
      %147 = vsyncadd [#allocation20], %s146
      %s148 = sshll.u32 [#allocation19], 4
      %s149 = int_to_ptr.vmem [resolvable:$true] %s148
      %154 = dma.hbm_to_vmem [thread:$0]  %s12, 256, %s149, [#allocation20], 64, 64, 4
    $region53: #{tpu_custom_call.1} parent=1 // pred_fallthru
      _
    // Predicated region
    $region54: #{tpu_custom_call.1} parent=1 // pred_check
      _
    $region55: #{tpu_custom_call.1} parent=1 // pred_check_branch
      %156 = sbr.rel (0) target = $region57
    $region56: #{tpu_custom_call.1} parent=1 // pred_region
      %s158 = ssub.s32 16, 16
      %159 = vsyncadd [#allocation20], %s158
      %s161 = sshll.u32 [#allocation21], 4
      %s162 = int_to_ptr.vmem [resolvable:$true] %s161
      %164 = dma.hbm_to_vmem [thread:$0]  %s13, 16, %s162, [#allocation20]
    $region57: #{tpu_custom_call.1} parent=1 // pred_fallthru
      _
    // Predicated region
    $region58: #{tpu_custom_call.1} parent=1 // pred_check
      _
    $region59: #{tpu_custom_call.1} parent=1 // pred_check_branch
      %166 = sbr.rel (0) target = $region61
    $region60: #{tpu_custom_call.1} parent=1 // pred_region
      _
    $region61: #{tpu_custom_call.1} parent=1 // pred_fallthru
      _
    // Predicated region
    $region62: #{tpu_custom_call.1} parent=1 // pred_check
      _
    $region63: #{tpu_custom_call.1} parent=1 // pred_check_branch
      %168 = sbr.rel (0) target = $region65
    $region64: #{tpu_custom_call.1} parent=1 // pred_region
      %s170 = ssub.s32 16, 16
      %171 = vsyncadd [#allocation23], %s170
      %s173 = sshll.u32 [#allocation22], 4
      %s174 = int_to_ptr.vmem [resolvable:$true] %s173
      %176 = dma.hbm_to_vmem [thread:$0]  %s15, 16, %s174, [#allocation23]
    $region65: #{tpu_custom_call.1} parent=1 // pred_fallthru
      _
    // Predicated region
    $region66: #{tpu_custom_call.1} parent=1 // pred_check
      _
    $region67: #{tpu_custom_call.1} parent=1 // pred_check_branch
      %178 = sbr.rel (0) target = $region69
    $region68: #{tpu_custom_call.1} parent=1 // pred_region
      %s180 = ssub.s32 256, 256
      %181 = vsyncadd [#allocation23], %s180
      %s182 = sshll.u32 [#allocation24], 4
      %s183 = int_to_ptr.vmem [resolvable:$true] %s182
      %188 = dma.hbm_to_vmem [thread:$0]  %s16, 256, %s183, [#allocation23], 64, 64, 4
    $region69: #{tpu_custom_call.1} parent=1 // pred_fallthru
      _
    // Predicated region
    $region70: #{tpu_custom_call.1} parent=1 // pred_check
      _
    $region71: #{tpu_custom_call.1} parent=1 // pred_check_branch
      %190 = sbr.rel (0) target = $region73
    $region72: #{tpu_custom_call.1} parent=1 // pred_region
      _
    $region73: #{tpu_custom_call.1} parent=1 // pred_fallthru
      _
    // Predicated region
    $region74: #{tpu_custom_call.1} parent=1 // pred_check
      _
    $region75: #{tpu_custom_call.1} parent=1 // pred_check_branch
      %192 = sbr.rel (0) target = $region77
    $region76: #{tpu_custom_call.1} parent=1 // pred_region
      %s194 = ssub.s32 256, 256
      %195 = vsyncadd [#allocation26], %s194
      %s196 = sshll.u32 [#allocation25], 4
      %s197 = int_to_ptr.vmem [resolvable:$true] %s196
      %202 = dma.hbm_to_vmem [thread:$0]  %s18, 256, %s197, [#allocation26], 64, 64, 4
    $region77: #{tpu_custom_call.1} parent=1 // pred_fallthru
      _
    // Predicated region
    $region78: #{tpu_custom_call.1} parent=1 // pred_check
      _
    $region79: #{tpu_custom_call.1} parent=1 // pred_check_branch
      %204 = sbr.rel (0) target = $region81
    $region80: #{tpu_custom_call.1} parent=1 // pred_region
      _
    $region81: #{tpu_custom_call.1} parent=1 // pred_fallthru
      _
    // Predicated region
    $region82: #{tpu_custom_call.1} parent=1 // pred_check
      _
    $region83: #{tpu_custom_call.1} parent=1 // pred_check_branch
      %206 = sbr.rel (0) target = $region85
    $region84: #{tpu_custom_call.1} parent=1 // pred_region
      %s208 = ssub.s32 256, 256
      %209 = vsyncadd [#allocation26], %s208
      %s210 = sshll.u32 [#allocation27], 4
      %s211 = int_to_ptr.vmem [resolvable:$true] %s210
      %216 = dma.hbm_to_vmem [thread:$0]  %s20, 256, %s211, [#allocation26], 64, 64, 4
    $region85: #{tpu_custom_call.1} parent=1 // pred_fallthru
      _
    // Predicated region
    $region86: #{tpu_custom_call.1} parent=1 // pred_check
      _
    $region87: #{tpu_custom_call.1} parent=1 // pred_check_branch
      %218 = sbr.rel (0) target = $region89
    $region88: #{tpu_custom_call.1} parent=1 // pred_region
      _
    $region89: #{tpu_custom_call.1} parent=1 // pred_fallthru
      _
    // Predicated region
    $region90: #{tpu_custom_call.1} parent=1 // pred_check
      _
    $region91: #{tpu_custom_call.1} parent=1 // pred_check_branch
      %220 = sbr.rel (0) target = $region93
    $region92: #{tpu_custom_call.1} parent=1 // pred_region
      %221 = dma.done [#allocation5], 16
    $region93: #{tpu_custom_call.1} parent=1 // pred_fallthru
      _
    // Predicated region
    $region94: #{tpu_custom_call.1} parent=1 // pred_check
      _
    $region95: #{tpu_custom_call.1} parent=1 // pred_check_branch
      %223 = sbr.rel (0) target = $region97
    $region96: #{tpu_custom_call.1} parent=1 // pred_region
      %224 = dma.done [#allocation3], 64
    $region97: #{tpu_custom_call.1} parent=1 // pred_fallthru
      _
    // Predicated region
    $region98: #{tpu_custom_call.1} parent=1 // pred_check
      _
    $region99: #{tpu_custom_call.1} parent=1 // pred_check_branch
      %226 = sbr.rel (0) target = $region101
    $region100: #{tpu_custom_call.1} parent=1 // pred_region
      %227 = dma.done [#allocation8], 64
    $region101: #{tpu_custom_call.1} parent=1 // pred_fallthru
      _
    // Predicated region
    $region102: #{tpu_custom_call.1} parent=1 // pred_check
      _
    $region103: #{tpu_custom_call.1} parent=1 // pred_check_branch
      %229 = sbr.rel (0) target = $region105
    $region104: #{tpu_custom_call.1} parent=1 // pred_region
      %230 = dma.done [#allocation8], 64
    $region105: #{tpu_custom_call.1} parent=1 // pred_fallthru
      _
    // Predicated region
    $region106: #{tpu_custom_call.1} parent=1 // pred_check
      _
    $region107: #{tpu_custom_call.1} parent=1 // pred_check_branch
      %232 = sbr.rel (0) target = $region109
    $region108: #{tpu_custom_call.1} parent=1 // pred_region
      %233 = dma.done [#allocation11], 256
    $region109: #{tpu_custom_call.1} parent=1 // pred_fallthru
      _
    // Predicated region
    $region110: #{tpu_custom_call.1} parent=1 // pred_check
      _
    $region111: #{tpu_custom_call.1} parent=1 // pred_check_branch
      %235 = sbr.rel (0) target = $region113
    $region112: #{tpu_custom_call.1} parent=1 // pred_region
      %236 = dma.done [#allocation11], 16
    $region113: #{tpu_custom_call.1} parent=1 // pred_fallthru
      _
    // Predicated region
    $region114: #{tpu_custom_call.1} parent=1 // pred_check
      _
    $region115: #{tpu_custom_call.1} parent=1 // pred_check_branch
      %238 = sbr.rel (0) target = $region117
    $region116: #{tpu_custom_call.1} parent=1 // pred_region
      %239 = dma.done [#allocation14], 16
    $region117: #{tpu_custom_call.1} parent=1 // pred_fallthru
      _
    // Predicated region
    $region118: #{tpu_custom_call.1} parent=1 // pred_check
      _
    $region119: #{tpu_custom_call.1} parent=1 // pred_check_branch
      %241 = sbr.rel (0) target = $region121
    $region120: #{tpu_custom_call.1} parent=1 // pred_region
      %242 = dma.done [#allocation14], 256
    $region121: #{tpu_custom_call.1} parent=1 // pred_fallthru
      _
    // Predicated region
    $region122: #{tpu_custom_call.1} parent=1 // pred_check
      _
    $region123: #{tpu_custom_call.1} parent=1 // pred_check_branch
      %244 = sbr.rel (0) target = $region125
    $region124: #{tpu_custom_call.1} parent=1 // pred_region
      %245 = dma.done [#allocation17], 16
    $region125: #{tpu_custom_call.1} parent=1 // pred_fallthru
      _
    // Predicated region
    $region126: #{tpu_custom_call.1} parent=1 // pred_check
      _
    $region127: #{tpu_custom_call.1} parent=1 // pred_check_branch
      %247 = sbr.rel (0) target = $region129
    $region128: #{tpu_custom_call.1} parent=1 // pred_region
      %248 = dma.done [#allocation17], 16
    $region129: #{tpu_custom_call.1} parent=1 // pred_fallthru
      _
    // Predicated region
    $region130: #{tpu_custom_call.1} parent=1 // pred_check
      _
    $region131: #{tpu_custom_call.1} parent=1 // pred_check_branch
      %250 = sbr.rel (0) target = $region133
    $region132: #{tpu_custom_call.1} parent=1 // pred_region
      %251 = dma.done [#allocation20], 256
    $region133: #{tpu_custom_call.1} parent=1 // pred_fallthru
      _
    // Predicated region
    $region134: #{tpu_custom_call.1} parent=1 // pred_check
      _
    $region135: #{tpu_custom_call.1} parent=1 // pred_check_branch
      %253 = sbr.rel (0) target = $region137
    $region136: #{tpu_custom_call.1} parent=1 // pred_region
      %254 = dma.done [#allocation20], 16
    $region137: #{tpu_custom_call.1} parent=1 // pred_fallthru
      _
    // Predicated region
    $region138: #{tpu_custom_call.1} parent=1 // pred_check
      _
    $region139: #{tpu_custom_call.1} parent=1 // pred_check_branch
      %256 = sbr.rel (0) target = $region141
    $region140: #{tpu_custom_call.1} parent=1 // pred_region
      %257 = dma.done [#allocation23], 16
    $region141: #{tpu_custom_call.1} parent=1 // pred_fallthru
      _
    // Predicated region
    $region142: #{tpu_custom_call.1} parent=1 // pred_check
      _
    $region143: #{tpu_custom_call.1} parent=1 // pred_check_branch
      %259 = sbr.rel (0) target = $region145
    $region144: #{tpu_custom_call.1} parent=1 // pred_region
      %260 = dma.done [#allocation23], 256
    $region145: #{tpu_custom_call.1} parent=1 // pred_fallthru
      _
    // Predicated region
    $region146: #{tpu_custom_call.1} parent=1 // pred_check
      _
    $region147: #{tpu_custom_call.1} parent=1 // pred_check_branch
      %262 = sbr.rel (0) target = $region149
    $region148: #{tpu_custom_call.1} parent=1 // pred_region
      %263 = dma.done [#allocation26], 256
    $region149: #{tpu_custom_call.1} parent=1 // pred_fallthru
      _
    // Predicated region
    $region150: #{tpu_custom_call.1} parent=1 // pred_check
      _
    $region151: #{tpu_custom_call.1} parent=1 // pred_check_branch
      %265 = sbr.rel (0) target = $region153
    $region152: #{tpu_custom_call.1} parent=1 // pred_region
      %266 = dma.done [#allocation26], 256
    $region153: #{tpu_custom_call.1} parent=1 // pred_fallthru
      _
    %267 = sfence
    %v269 = vld [vmem:[#allocation6] sm:$0xf]
    %v270 = vld [vmem:[#allocation10] sm:$0xf]
    %v271 = vld [vmem:[#allocation10 + $0x4] sm:$0xf]
    %v272 = vld [vmem:[#allocation10 + $0x8] sm:$0xf]
    %v273 = vld [vmem:[#allocation10 + $0xc] sm:$0xf]
    %v274 = vld [vmem:[#allocation12] sm:$0x1]
    %v276 = vlaneseq
    %v277 = vshrl.u32 %v276, 7
    %v278 = vsub.s32 0, %v277
    %v279 = vrot.slane %v274, %v278
    %v285 = vunpack.c.l.b16 %v270
    %v286 = vunpack.c.l.b16 %v271
    %v287 = vunpack.c.l.b16 %v272
    %v288 = vunpack.c.l.b16 %v273
    %v289 = vpack.c.b16 %v286, %v285
    %v290 = vpack.c.b16 %v288, %v287
    %vm293 = vcmask 261120
    %v295 = vsel %vm293, %v269, 0
    %297 = vmatprep.subr.bf16.mxu0 0
    %298 = vmatpush1.bf16.msra.mxu0 %v289
    %299 = vmatprep.subr.bf16.mxu0 0
    %300 = vmatpush1.bf16.msra.mxu0 %v290
    %301 = vmatprep.subr.bf16.mxu0 0
    %302 = vmatpush1.bf16.msra.mxu0 0
    %303 = vmatprep.subr.bf16.mxu0 0
    %304 = vmatpush1.bf16.msra.mxu0 0
    %305 = vmatprep.subr.bf16.mxu0 0
    %306 = vmatpush1.bf16.msra.mxu0 0
    %307 = vmatprep.subr.bf16.mxu0 0
    %308 = vmatpush1.bf16.msra.mxu0 0
    %309 = vmatprep.subr.bf16.mxu0 0
    %310 = vmatpush1.bf16.msra.mxu0 0
    %311 = vmatprep.subr.bf16.mxu0 0
    %312 = vmatpush1.bf16.msra.mxu0 0
    %313 = vmatprep.subr.bf16.mxu0 0
    %314 = vmatpush1.bf16.msra.mxu0 0
    %315 = vmatprep.subr.bf16.mxu0 0
    %316 = vmatpush1.bf16.msra.mxu0 0
    %317 = vmatprep.subr.bf16.mxu0 0
    %318 = vmatpush1.bf16.msra.mxu0 0
    %319 = vmatprep.subr.bf16.mxu0 0
    %320 = vmatpush1.bf16.msra.mxu0 0
    %321 = vmatprep.subr.bf16.mxu0 0
    %322 = vmatpush1.bf16.msra.mxu0 0
    %323 = vmatprep.subr.bf16.mxu0 0
    %324 = vmatpush1.bf16.msra.mxu0 0
    %325 = vmatprep.subr.bf16.mxu0 0
    %326 = vmatpush1.bf16.msra.mxu0 0
    %327 = vmatprep.subr.bf16.mxu0 0
    %328 = vmatpush1.bf16.msra.mxu0 0
    %329 = vmatprep.mubr.bf16.mxu0 0
    %330 = vmatmul.mubr.bf16.gmra.mrb[0].mxu0 %v295
    %v331 = vpop.f32.mrb[0].mxu0
    %v332 = vadd.f32 %v279, %v331
    %v333 = vpop.f32.mrb[0].mxu0
    %v334 = vpop.f32.mrb[0].mxu0
    %v335 = vpop.f32.mrb[0].mxu0
    %336 = vdwg.mxu0
    %s337 = sld [smem:[#allocation2]]
    %vm338 = vcmp.gt.f32.partialorder %v332, 0.0
    %v339 = vstv %s337
    %v340 = vmul.f32 %v339, %v332
    %v341 = vsel %vm338, %v332, %v340
    %v342 = vpack.c.bf16 %v341, %v341
    %v343 = vld [vmem:[%s6] sm:$0xf]
    %v344 = vld [vmem:[%s6 + $0x4] sm:$0xf]
    %v345 = vld [vmem:[%s6 + $0x8] sm:$0xf]
    %v346 = vld [vmem:[%s6 + $0xc] sm:$0xf]
    %v347 = vld [vmem:[#allocation13] sm:$0x1]
    %v349 = vlaneseq
    %v350 = vshrl.u32 %v349, 7
    %v351 = vsub.s32 0, %v350
    %v352 = vrot.slane %v347, %v351
    %v358 = vunpack.c.l.b16 %v343
    %v359 = vunpack.c.l.b16 %v344
    %v360 = vunpack.c.l.b16 %v345
    %v361 = vunpack.c.l.b16 %v346
    %v362 = vpack.c.b16 %v359, %v358
    %v363 = vpack.c.b16 %v361, %v360
    %v367 = vsel %vm293, %v342, 0
    %369 = vmatprep.subr.bf16.mxu0 0
    %370 = vmatpush1.bf16.msra.mxu0 %v362
    %371 = vmatprep.subr.bf16.mxu0 0
    %372 = vmatpush1.bf16.msra.mxu0 %v363
    %373 = vmatprep.subr.bf16.mxu0 0
    %374 = vmatpush1.bf16.msra.mxu0 0
    %375 = vmatprep.subr.bf16.mxu0 0
    %376 = vmatpush1.bf16.msra.mxu0 0
    %377 = vmatprep.subr.bf16.mxu0 0
    %378 = vmatpush1.bf16.msra.mxu0 0
    %379 = vmatprep.subr.bf16.mxu0 0
    %380 = vmatpush1.bf16.msra.mxu0 0
    %381 = vmatprep.subr.bf16.mxu0 0
    %382 = vmatpush1.bf16.msra.mxu0 0
    %383 = vmatprep.subr.bf16.mxu0 0
    %384 = vmatpush1.bf16.msra.mxu0 0
    %385 = vmatprep.subr.bf16.mxu0 0
    %386 = vmatpush1.bf16.msra.mxu0 0
    %387 = vmatprep.subr.bf16.mxu0 0
    %388 = vmatpush1.bf16.msra.mxu0 0
    %389 = vmatprep.subr.bf16.mxu0 0
    %390 = vmatpush1.bf16.msra.mxu0 0
    %391 = vmatprep.subr.bf16.mxu0 0
    %392 = vmatpush1.bf16.msra.mxu0 0
    %393 = vmatprep.subr.bf16.mxu0 0
    %394 = vmatpush1.bf16.msra.mxu0 0
    %395 = vmatprep.subr.bf16.mxu0 0
    %396 = vmatpush1.bf16.msra.mxu0 0
    %397 = vmatprep.subr.bf16.mxu0 0
    %398 = vmatpush1.bf16.msra.mxu0 0
    %399 = vmatprep.subr.bf16.mxu0 0
    %400 = vmatpush1.bf16.msra.mxu0 0
    %401 = vmatprep.mubr.bf16.mxu0 0
    %402 = vmatmul.mubr.bf16.gmra.mrb[0].mxu0 %v367
    %v403 = vpop.f32.mrb[0].mxu0
    %v404 = vadd.f32 %v352, %v403
    %v405 = vpop.f32.mrb[0].mxu0
    %v406 = vpop.f32.mrb[0].mxu0
    %v407 = vpop.f32.mrb[0].mxu0
    %408 = vdwg.mxu0
    %s409 = sld [smem:[#allocation2 + $0x3]]
    %vm410 = vcmp.gt.f32.partialorder %v404, 0.0
    %v411 = vstv %s409
    %v412 = vmul.f32 %v411, %v404
    %v413 = vsel %vm410, %v404, %v412
    %v414 = vpack.c.bf16 %v413, %v413
    %v415 = vld [vmem:[#allocation24] sm:$0xf]
    %v416 = vld [vmem:[#allocation24 + $0x4] sm:$0xf]
    %v417 = vld [vmem:[#allocation24 + $0x8] sm:$0xf]
    %v418 = vld [vmem:[#allocation24 + $0xc] sm:$0xf]
    %v419 = vld [vmem:[#allocation7] sm:$0xf]
    %v420 = vld [vmem:[#allocation15] sm:$0xf]
    %v421 = vld [vmem:[#allocation15 + $0x4] sm:$0xf]
    %v422 = vld [vmem:[#allocation15 + $0x8] sm:$0xf]
    %v423 = vld [vmem:[#allocation15 + $0xc] sm:$0xf]
    %v424 = vld [vmem:[#allocation16] sm:$0x1]
    %v426 = vlaneseq
    %v427 = vshrl.u32 %v426, 7
    %v428 = vsub.s32 0, %v427
    %v429 = vrot.slane %v424, %v428
    %v435 = vunpack.c.l.b16 %v420
    %v436 = vunpack.c.l.b16 %v421
    %v437 = vunpack.c.l.b16 %v422
    %v438 = vunpack.c.l.b16 %v423
    %v439 = vpack.c.b16 %v436, %v435
    %v440 = vpack.c.b16 %v438, %v437
    %v444 = vsel %vm293, %v419, 0
    %446 = vmatprep.subr.bf16.mxu0 0
    %447 = vmatpush1.bf16.msra.mxu0 %v439
    %448 = vmatprep.subr.bf16.mxu0 0
    %449 = vmatpush1.bf16.msra.mxu0 %v440
    %450 = vmatprep.subr.bf16.mxu0 0
    %451 = vmatpush1.bf16.msra.mxu0 0
    %452 = vmatprep.subr.bf16.mxu0 0
    %453 = vmatpush1.bf16.msra.mxu0 0
    %454 = vmatprep.subr.bf16.mxu0 0
    %455 = vmatpush1.bf16.msra.mxu0 0
    %456 = vmatprep.subr.bf16.mxu0 0
    %457 = vmatpush1.bf16.msra.mxu0 0
    %458 = vmatprep.subr.bf16.mxu0 0
    %459 = vmatpush1.bf16.msra.mxu0 0
    %460 = vmatprep.subr.bf16.mxu0 0
    %461 = vmatpush1.bf16.msra.mxu0 0
    %462 = vmatprep.subr.bf16.mxu0 0
    %463 = vmatpush1.bf16.msra.mxu0 0
    %464 = vmatprep.subr.bf16.mxu0 0
    %465 = vmatpush1.bf16.msra.mxu0 0
    %466 = vmatprep.subr.bf16.mxu0 0
    %467 = vmatpush1.bf16.msra.mxu0 0
    %468 = vmatprep.subr.bf16.mxu0 0
    %469 = vmatpush1.bf16.msra.mxu0 0
    %470 = vmatprep.subr.bf16.mxu0 0
    %471 = vmatpush1.bf16.msra.mxu0 0
    %472 = vmatprep.subr.bf16.mxu0 0
    %473 = vmatpush1.bf16.msra.mxu0 0
    %474 = vmatprep.subr.bf16.mxu0 0
    %475 = vmatpush1.bf16.msra.mxu0 0
    %476 = vmatprep.subr.bf16.mxu0 0
    %477 = vmatpush1.bf16.msra.mxu0 0
    %478 = vmatprep.mubr.bf16.mxu0 0
    %479 = vmatmul.mubr.bf16.gmra.mrb[0].mxu0 %v444
    %v480 = vpop.f32.mrb[0].mxu0
    %v481 = vadd.f32 %v429, %v480
    %v482 = vpop.f32.mrb[0].mxu0
    %v483 = vpop.f32.mrb[0].mxu0
    %v484 = vpop.f32.mrb[0].mxu0
    %485 = vdwg.mxu0
    %s486 = sld [smem:[#allocation2 + $0x1]]
    %vm487 = vcmp.gt.f32.partialorder %v481, 0.0
    %v488 = vstv %s486
    %v489 = vmul.f32 %v488, %v481
    %v490 = vsel %vm487, %v481, %v489
    %v491 = vpack.c.bf16 %v490, %v490
    %v492 = vld [vmem:[%s10] sm:$0xf]
    %v493 = vld [vmem:[%s10 + $0x4] sm:$0xf]
    %v494 = vld [vmem:[%s10 + $0x8] sm:$0xf]
    %v495 = vld [vmem:[%s10 + $0xc] sm:$0xf]
    %v496 = vld [vmem:[#allocation18] sm:$0x1]
    %v498 = vlaneseq
    %v499 = vshrl.u32 %v498, 7
    %v500 = vsub.s32 0, %v499
    %v501 = vrot.slane %v496, %v500
    %v507 = vunpack.c.l.b16 %v492
    %v508 = vunpack.c.l.b16 %v493
    %v509 = vunpack.c.l.b16 %v494
    %v510 = vunpack.c.l.b16 %v495
    %v511 = vpack.c.b16 %v508, %v507
    %v512 = vpack.c.b16 %v510, %v509
    %v516 = vsel %vm293, %v491, 0
    %518 = vmatprep.subr.bf16.mxu0 0
    %519 = vmatpush1.bf16.msra.mxu0 %v511
    %520 = vmatprep.subr.bf16.mxu0 0
    %521 = vmatpush1.bf16.msra.mxu0 %v512
    %522 = vmatprep.subr.bf16.mxu0 0
    %523 = vmatpush1.bf16.msra.mxu0 0
    %524 = vmatprep.subr.bf16.mxu0 0
    %525 = vmatpush1.bf16.msra.mxu0 0
    %526 = vmatprep.subr.bf16.mxu0 0
    %527 = vmatpush1.bf16.msra.mxu0 0
    %528 = vmatprep.subr.bf16.mxu0 0
    %529 = vmatpush1.bf16.msra.mxu0 0
    %530 = vmatprep.subr.bf16.mxu0 0
    %531 = vmatpush1.bf16.msra.mxu0 0
    %532 = vmatprep.subr.bf16.mxu0 0
    %533 = vmatpush1.bf16.msra.mxu0 0
    %534 = vmatprep.subr.bf16.mxu0 0
    %535 = vmatpush1.bf16.msra.mxu0 0
    %536 = vmatprep.subr.bf16.mxu0 0
    %537 = vmatpush1.bf16.msra.mxu0 0
    %538 = vmatprep.subr.bf16.mxu0 0
    %539 = vmatpush1.bf16.msra.mxu0 0
    %540 = vmatprep.subr.bf16.mxu0 0
    %541 = vmatpush1.bf16.msra.mxu0 0
    %542 = vmatprep.subr.bf16.mxu0 0
    %543 = vmatpush1.bf16.msra.mxu0 0
    %544 = vmatprep.subr.bf16.mxu0 0
    %545 = vmatpush1.bf16.msra.mxu0 0
    %546 = vmatprep.subr.bf16.mxu0 0
    %547 = vmatpush1.bf16.msra.mxu0 0
    %548 = vmatprep.subr.bf16.mxu0 0
    %549 = vmatpush1.bf16.msra.mxu0 0
    %550 = vmatprep.mubr.bf16.mxu0 0
    %551 = vmatmul.mubr.bf16.gmra.mrb[0].mxu0 %v516
    %v552 = vpop.f32.mrb[0].mxu0
    %v553 = vadd.f32 %v501, %v552
    %v554 = vpop.f32.mrb[0].mxu0
    %v555 = vpop.f32.mrb[0].mxu0
    %v556 = vpop.f32.mrb[0].mxu0
    %557 = vdwg.mxu0
    %vm558 = vcmp.gt.f32.partialorder %v553, 0.0
    %v559 = vmul.f32 %v411, %v553
    %v560 = vsel %vm558, %v553, %v559
    %v561 = vpack.c.bf16 %v560, %v560
    %v562 = vld [vmem:[%s17] sm:$0xf]
    %v563 = vld [vmem:[%s17 + $0x4] sm:$0xf]
    %v564 = vld [vmem:[%s17 + $0x8] sm:$0xf]
    %v565 = vld [vmem:[%s17 + $0xc] sm:$0xf]
    %v570 = vunpack.c.l.b16 %v562
    %v571 = vunpack.c.l.b16 %v563
    %v572 = vunpack.c.l.b16 %v564
    %v573 = vunpack.c.l.b16 %v565
    %v574 = vpack.c.b16 %v571, %v570
    %v575 = vpack.c.b16 %v573, %v572
    %v579 = vsel %vm293, %v561, 0
    %581 = vmatprep.subr.bf16.mxu0 0
    %582 = vmatpush1.bf16.msra.mxu0 %v574
    %583 = vmatprep.subr.bf16.mxu0 0
    %584 = vmatpush1.bf16.msra.mxu0 %v575
    %585 = vmatprep.subr.bf16.mxu0 0
    %586 = vmatpush1.bf16.msra.mxu0 0
    %587 = vmatprep.subr.bf16.mxu0 0
    %588 = vmatpush1.bf16.msra.mxu0 0
    %589 = vmatprep.subr.bf16.mxu0 0
    %590 = vmatpush1.bf16.msra.mxu0 0
    %591 = vmatprep.subr.bf16.mxu0 0
    %592 = vmatpush1.bf16.msra.mxu0 0
    %593 = vmatprep.subr.bf16.mxu0 0
    %594 = vmatpush1.bf16.msra.mxu0 0
    %595 = vmatprep.subr.bf16.mxu0 0
    %596 = vmatpush1.bf16.msra.mxu0 0
    %597 = vmatprep.subr.bf16.mxu0 0
    %598 = vmatpush1.bf16.msra.mxu0 0
    %599 = vmatprep.subr.bf16.mxu0 0
    %600 = vmatpush1.bf16.msra.mxu0 0
    %601 = vmatprep.subr.bf16.mxu0 0
    %602 = vmatpush1.bf16.msra.mxu0 0
    %603 = vmatprep.subr.bf16.mxu0 0
    %604 = vmatpush1.bf16.msra.mxu0 0
    %605 = vmatprep.subr.bf16.mxu0 0
    %606 = vmatpush1.bf16.msra.mxu0 0
    %607 = vmatprep.subr.bf16.mxu0 0
    %608 = vmatpush1.bf16.msra.mxu0 0
    %609 = vmatprep.subr.bf16.mxu0 0
    %610 = vmatpush1.bf16.msra.mxu0 0
    %611 = vmatprep.subr.bf16.mxu0 0
    %612 = vmatpush1.bf16.msra.mxu0 0
    %613 = vmatprep.mubr.bf16.mxu0 0
    %614 = vmatmul.mubr.bf16.gmra.mrb[0].mxu0 %v579
    %v615 = vpop.f32.mrb[0].mxu0
    %v616 = vadd.f32 0.0, %v615
    %v617 = vpop.f32.mrb[0].mxu0
    %v618 = vpop.f32.mrb[0].mxu0
    %v619 = vpop.f32.mrb[0].mxu0
    %620 = vdwg.mxu0
    %v625 = vunpack.c.l.b16 %v415
    %v626 = vunpack.c.l.b16 %v416
    %v627 = vunpack.c.l.b16 %v417
    %v628 = vunpack.c.l.b16 %v418
    %v629 = vpack.c.b16 %v626, %v625
    %v630 = vpack.c.b16 %v628, %v627
    %v634 = vsel %vm293, %v414, 0
    %636 = vmatprep.subr.bf16.mxu0 0
    %637 = vmatpush1.bf16.msra.mxu0 %v629
    %638 = vmatprep.subr.bf16.mxu0 0
    %639 = vmatpush1.bf16.msra.mxu0 %v630
    %640 = vmatprep.subr.bf16.mxu0 0
    %641 = vmatpush1.bf16.msra.mxu0 0
    %642 = vmatprep.subr.bf16.mxu0 0
    %643 = vmatpush1.bf16.msra.mxu0 0
    %644 = vmatprep.subr.bf16.mxu0 0
    %645 = vmatpush1.bf16.msra.mxu0 0
    %646 = vmatprep.subr.bf16.mxu0 0
    %647 = vmatpush1.bf16.msra.mxu0 0
    %648 = vmatprep.subr.bf16.mxu0 0
    %649 = vmatpush1.bf16.msra.mxu0 0
    %650 = vmatprep.subr.bf16.mxu0 0
    %651 = vmatpush1.bf16.msra.mxu0 0
    %652 = vmatprep.subr.bf16.mxu0 0
    %653 = vmatpush1.bf16.msra.mxu0 0
    %654 = vmatprep.subr.bf16.mxu0 0
    %655 = vmatpush1.bf16.msra.mxu0 0
    %656 = vmatprep.subr.bf16.mxu0 0
    %657 = vmatpush1.bf16.msra.mxu0 0
    %658 = vmatprep.subr.bf16.mxu0 0
    %659 = vmatpush1.bf16.msra.mxu0 0
    %660 = vmatprep.subr.bf16.mxu0 0
    %661 = vmatpush1.bf16.msra.mxu0 0
    %662 = vmatprep.subr.bf16.mxu0 0
    %663 = vmatpush1.bf16.msra.mxu0 0
    %664 = vmatprep.subr.bf16.mxu0 0
    %665 = vmatpush1.bf16.msra.mxu0 0
    %666 = vmatprep.subr.bf16.mxu0 0
    %667 = vmatpush1.bf16.msra.mxu0 0
    %668 = vmatprep.mubr.bf16.mxu0 0
    %669 = vmatmul.mubr.bf16.gmra.mrb[0].mxu0 %v634
    %v670 = vpop.f32.mrb[0].mxu0
    %v671 = vadd.f32 %v616, %v670
    %v672 = vpop.f32.mrb[0].mxu0
    %v673 = vpop.f32.mrb[0].mxu0
    %v674 = vpop.f32.mrb[0].mxu0
    %675 = vdwg.mxu0
    %v676 = vld [vmem:[#allocation9] sm:$0xf]
    %v677 = vld [vmem:[#allocation19] sm:$0xf]
    %v678 = vld [vmem:[#allocation19 + $0x4] sm:$0xf]
    %v679 = vld [vmem:[#allocation19 + $0x8] sm:$0xf]
    %v680 = vld [vmem:[#allocation19 + $0xc] sm:$0xf]
    %v681 = vld [vmem:[#allocation21] sm:$0x1]
    %v683 = vlaneseq
    %v684 = vshrl.u32 %v683, 7
    %v685 = vsub.s32 0, %v684
    %v686 = vrot.slane %v681, %v685
    %v692 = vunpack.c.l.b16 %v677
    %v693 = vunpack.c.l.b16 %v678
    %v694 = vunpack.c.l.b16 %v679
    %v695 = vunpack.c.l.b16 %v680
    %v696 = vpack.c.b16 %v693, %v692
    %v697 = vpack.c.b16 %v695, %v694
    %v701 = vsel %vm293, %v676, 0
    %703 = vmatprep.subr.bf16.mxu0 0
    %704 = vmatpush1.bf16.msra.mxu0 %v696
    %705 = vmatprep.subr.bf16.mxu0 0
    %706 = vmatpush1.bf16.msra.mxu0 %v697
    %707 = vmatprep.subr.bf16.mxu0 0
    %708 = vmatpush1.bf16.msra.mxu0 0
    %709 = vmatprep.subr.bf16.mxu0 0
    %710 = vmatpush1.bf16.msra.mxu0 0
    %711 = vmatprep.subr.bf16.mxu0 0
    %712 = vmatpush1.bf16.msra.mxu0 0
    %713 = vmatprep.subr.bf16.mxu0 0
    %714 = vmatpush1.bf16.msra.mxu0 0
    %715 = vmatprep.subr.bf16.mxu0 0
    %716 = vmatpush1.bf16.msra.mxu0 0
    %717 = vmatprep.subr.bf16.mxu0 0
    %718 = vmatpush1.bf16.msra.mxu0 0
    %719 = vmatprep.subr.bf16.mxu0 0
    %720 = vmatpush1.bf16.msra.mxu0 0
    %721 = vmatprep.subr.bf16.mxu0 0
    %722 = vmatpush1.bf16.msra.mxu0 0
    %723 = vmatprep.subr.bf16.mxu0 0
    %724 = vmatpush1.bf16.msra.mxu0 0
    %725 = vmatprep.subr.bf16.mxu0 0
    %726 = vmatpush1.bf16.msra.mxu0 0
    %727 = vmatprep.subr.bf16.mxu0 0
    %728 = vmatpush1.bf16.msra.mxu0 0
    %729 = vmatprep.subr.bf16.mxu0 0
    %730 = vmatpush1.bf16.msra.mxu0 0
    %731 = vmatprep.subr.bf16.mxu0 0
    %732 = vmatpush1.bf16.msra.mxu0 0
    %733 = vmatprep.subr.bf16.mxu0 0
    %734 = vmatpush1.bf16.msra.mxu0 0
    %735 = vmatprep.mubr.bf16.mxu0 0
    %736 = vmatmul.mubr.bf16.gmra.mrb[0].mxu0 %v701
    %v737 = vpop.f32.mrb[0].mxu0
    %v738 = vadd.f32 %v686, %v737
    %v739 = vpop.f32.mrb[0].mxu0
    %v740 = vpop.f32.mrb[0].mxu0
    %v741 = vpop.f32.mrb[0].mxu0
    %742 = vdwg.mxu0
    %s743 = sld [smem:[#allocation2 + $0x2]]
    %vm744 = vcmp.gt.f32.partialorder %v738, 0.0
    %v745 = vstv %s743
    %v746 = vmul.f32 %v745, %v738
    %v747 = vsel %vm744, %v738, %v746
    %v748 = vpack.c.bf16 %v747, %v747
    %v749 = vld [vmem:[%s14] sm:$0xf]
    %v750 = vld [vmem:[%s14 + $0x4] sm:$0xf]
    %v751 = vld [vmem:[%s14 + $0x8] sm:$0xf]
    %v752 = vld [vmem:[%s14 + $0xc] sm:$0xf]
    %v753 = vld [vmem:[#allocation22] sm:$0x1]
    %v755 = vlaneseq
    %v756 = vshrl.u32 %v755, 7
    %v757 = vsub.s32 0, %v756
    %v758 = vrot.slane %v753, %v757
    %v764 = vunpack.c.l.b16 %v749
    %v765 = vunpack.c.l.b16 %v750
    %v766 = vunpack.c.l.b16 %v751
    %v767 = vunpack.c.l.b16 %v752
    %v768 = vpack.c.b16 %v765, %v764
    %v769 = vpack.c.b16 %v767, %v766
    %v773 = vsel %vm293, %v748, 0
    %775 = vmatprep.subr.bf16.mxu0 0
    %776 = vmatpush1.bf16.msra.mxu0 %v768
    %777 = vmatprep.subr.bf16.mxu0 0
    %778 = vmatpush1.bf16.msra.mxu0 %v769
    %779 = vmatprep.subr.bf16.mxu0 0
    %780 = vmatpush1.bf16.msra.mxu0 0
    %781 = vmatprep.subr.bf16.mxu0 0
    %782 = vmatpush1.bf16.msra.mxu0 0
    %783 = vmatprep.subr.bf16.mxu0 0
    %784 = vmatpush1.bf16.msra.mxu0 0
    %785 = vmatprep.subr.bf16.mxu0 0
    %786 = vmatpush1.bf16.msra.mxu0 0
    %787 = vmatprep.subr.bf16.mxu0 0
    %788 = vmatpush1.bf16.msra.mxu0 0
    %789 = vmatprep.subr.bf16.mxu0 0
    %790 = vmatpush1.bf16.msra.mxu0 0
    %791 = vmatprep.subr.bf16.mxu0 0
    %792 = vmatpush1.bf16.msra.mxu0 0
    %793 = vmatprep.subr.bf16.mxu0 0
    %794 = vmatpush1.bf16.msra.mxu0 0
    %795 = vmatprep.subr.bf16.mxu0 0
    %796 = vmatpush1.bf16.msra.mxu0 0
    %797 = vmatprep.subr.bf16.mxu0 0
    %798 = vmatpush1.bf16.msra.mxu0 0
    %799 = vmatprep.subr.bf16.mxu0 0
    %800 = vmatpush1.bf16.msra.mxu0 0
    %801 = vmatprep.subr.bf16.mxu0 0
    %802 = vmatpush1.bf16.msra.mxu0 0
    %803 = vmatprep.subr.bf16.mxu0 0
    %804 = vmatpush1.bf16.msra.mxu0 0
    %805 = vmatprep.subr.bf16.mxu0 0
    %806 = vmatpush1.bf16.msra.mxu0 0
    %807 = vmatprep.mubr.bf16.mxu0 0
    %808 = vmatmul.mubr.bf16.gmra.mrb[0].mxu0 %v773
    %v809 = vpop.f32.mrb[0].mxu0
    %v810 = vadd.f32 %v758, %v809
    %v811 = vpop.f32.mrb[0].mxu0
    %v812 = vpop.f32.mrb[0].mxu0
    %v813 = vpop.f32.mrb[0].mxu0
    %814 = vdwg.mxu0
    %vm815 = vcmp.gt.f32.partialorder %v810, 0.0
    %v816 = vmul.f32 %v411, %v810
    %v817 = vsel %vm815, %v810, %v816
    %v818 = vpack.c.bf16 %v817, %v817
    %v819 = vld [vmem:[#allocation25] sm:$0xf]
    %v820 = vld [vmem:[#allocation25 + $0x4] sm:$0xf]
    %v821 = vld [vmem:[#allocation25 + $0x8] sm:$0xf]
    %v822 = vld [vmem:[#allocation25 + $0xc] sm:$0xf]
    %v827 = vunpack.c.l.b16 %v819
    %v828 = vunpack.c.l.b16 %v820
    %v829 = vunpack.c.l.b16 %v821
    %v830 = vunpack.c.l.b16 %v822
    %v831 = vpack.c.b16 %v828, %v827
    %v832 = vpack.c.b16 %v830, %v829
    %v836 = vsel %vm293, %v818, 0
    %838 = vmatprep.subr.bf16.mxu0 0
    %839 = vmatpush1.bf16.msra.mxu0 %v831
    %840 = vmatprep.subr.bf16.mxu0 0
    %841 = vmatpush1.bf16.msra.mxu0 %v832
    %842 = vmatprep.subr.bf16.mxu0 0
    %843 = vmatpush1.bf16.msra.mxu0 0
    %844 = vmatprep.subr.bf16.mxu0 0
    %845 = vmatpush1.bf16.msra.mxu0 0
    %846 = vmatprep.subr.bf16.mxu0 0
    %847 = vmatpush1.bf16.msra.mxu0 0
    %848 = vmatprep.subr.bf16.mxu0 0
    %849 = vmatpush1.bf16.msra.mxu0 0
    %850 = vmatprep.subr.bf16.mxu0 0
    %851 = vmatpush1.bf16.msra.mxu0 0
    %852 = vmatprep.subr.bf16.mxu0 0
    %853 = vmatpush1.bf16.msra.mxu0 0
    %854 = vmatprep.subr.bf16.mxu0 0
    %855 = vmatpush1.bf16.msra.mxu0 0
    %856 = vmatprep.subr.bf16.mxu0 0
    %857 = vmatpush1.bf16.msra.mxu0 0
    %858 = vmatprep.subr.bf16.mxu0 0
    %859 = vmatpush1.bf16.msra.mxu0 0
    %860 = vmatprep.subr.bf16.mxu0 0
    %861 = vmatpush1.bf16.msra.mxu0 0
    %862 = vmatprep.subr.bf16.mxu0 0
    %863 = vmatpush1.bf16.msra.mxu0 0
    %864 = vmatprep.subr.bf16.mxu0 0
    %865 = vmatpush1.bf16.msra.mxu0 0
    %866 = vmatprep.subr.bf16.mxu0 0
    %867 = vmatpush1.bf16.msra.mxu0 0
    %868 = vmatprep.subr.bf16.mxu0 0
    %869 = vmatpush1.bf16.msra.mxu0 0
    %870 = vmatprep.mubr.bf16.mxu0 0
    %871 = vmatmul.mubr.bf16.gmra.mrb[0].mxu0 %v836
    %v872 = vpop.f32.mrb[0].mxu0
    %v873 = vadd.f32 0.0, %v872
    %v874 = vpop.f32.mrb[0].mxu0
    %v875 = vpop.f32.mrb[0].mxu0
    %v876 = vpop.f32.mrb[0].mxu0
    %877 = vdwg.mxu0
    %v878 = vadd.f32 %v671, %v873
    %v879 = vld [vmem:[%s19] sm:$0x1]
    %v881 = vlaneseq
    %v882 = vshrl.u32 %v881, 7
    %v883 = vsub.s32 0, %v882
    %v884 = vrot.slane %v879, %v883
    %v886 = vadd.f32 %v878, %v884
    %s887 = sld [smem:[#allocation2 + $0x4]]
    %vm888 = vcmp.gt.f32.partialorder %v886, 0.0
    %v889 = vstv %s887
    %v890 = vmul.f32 %v889, %v886
    %v891 = vsel %vm888, %v886, %v890
    %v892 = vpack.c.bf16 %v891, %v891
    %v893 = vld [vmem:[#allocation27] sm:$0xf]
    %v894 = vld [vmem:[#allocation27 + $0x4] sm:$0xf]
    %v895 = vld [vmem:[#allocation27 + $0x8] sm:$0xf]
    %v896 = vld [vmem:[#allocation27 + $0xc] sm:$0xf]
    %v897 = vld [vmem:[%s21] sm:$0x1]
    %v899 = vlaneseq
    %v900 = vshrl.u32 %v899, 7
    %v901 = vsub.s32 0, %v900
    %v902 = vrot.slane %v897, %v901
    %v908 = vunpack.c.l.b16 %v893
    %v909 = vunpack.c.l.b16 %v894
    %v910 = vunpack.c.l.b16 %v895
    %v911 = vunpack.c.l.b16 %v896
    %v912 = vpack.c.b16 %v909, %v908
    %v913 = vpack.c.b16 %v911, %v910
    %v917 = vsel %vm293, %v892, 0
    %919 = vmatprep.subr.bf16.mxu0 0
    %920 = vmatpush1.bf16.msra.mxu0 %v912
    %921 = vmatprep.subr.bf16.mxu0 0
    %922 = vmatpush1.bf16.msra.mxu0 %v913
    %923 = vmatprep.subr.bf16.mxu0 0
    %924 = vmatpush1.bf16.msra.mxu0 0
    %925 = vmatprep.subr.bf16.mxu0 0
    %926 = vmatpush1.bf16.msra.mxu0 0
    %927 = vmatprep.subr.bf16.mxu0 0
    %928 = vmatpush1.bf16.msra.mxu0 0
    %929 = vmatprep.subr.bf16.mxu0 0
    %930 = vmatpush1.bf16.msra.mxu0 0
    %931 = vmatprep.subr.bf16.mxu0 0
    %932 = vmatpush1.bf16.msra.mxu0 0
    %933 = vmatprep.subr.bf16.mxu0 0
    %934 = vmatpush1.bf16.msra.mxu0 0
    %935 = vmatprep.subr.bf16.mxu0 0
    %936 = vmatpush1.bf16.msra.mxu0 0
    %937 = vmatprep.subr.bf16.mxu0 0
    %938 = vmatpush1.bf16.msra.mxu0 0
    %939 = vmatprep.subr.bf16.mxu0 0
    %940 = vmatpush1.bf16.msra.mxu0 0
    %941 = vmatprep.subr.bf16.mxu0 0
    %942 = vmatpush1.bf16.msra.mxu0 0
    %943 = vmatprep.subr.bf16.mxu0 0
    %944 = vmatpush1.bf16.msra.mxu0 0
    %945 = vmatprep.subr.bf16.mxu0 0
    %946 = vmatpush1.bf16.msra.mxu0 0
    %947 = vmatprep.subr.bf16.mxu0 0
    %948 = vmatpush1.bf16.msra.mxu0 0
    %949 = vmatprep.subr.bf16.mxu0 0
    %950 = vmatpush1.bf16.msra.mxu0 0
    %951 = vmatprep.mubr.bf16.mxu0 0
    %952 = vmatmul.mubr.bf16.gmra.mrb[0].mxu0 %v917
    %v953 = vpop.f32.mrb[0].mxu0
    %v954 = vadd.f32 %v902, %v953
    %v955 = vpop.f32.mrb[0].mxu0
    %v956 = vpop.f32.mrb[0].mxu0
    %v957 = vpop.f32.mrb[0].mxu0
    %958 = vdwg.mxu0
    %v959 = vpack.c.bf16 %v954, %v954
    %960 = vst [vmem:[#allocation28] sm:$0xf] %v959
    // Predicated region
    $region154: #{tpu_custom_call.1} parent=1 // pred_check
      _
    $region155: #{tpu_custom_call.1} parent=1 // pred_check_branch
      %962 = sbr.rel (0) target = $region157
    $region156: #{tpu_custom_call.1} parent=1 // pred_region
      %s964 = ssub.s32 64, 64
      %965 = vsyncadd [#allocation4], %s964
      %s967 = sshll.u32 [#allocation28], 4
      %s968 = int_to_ptr.vmem [resolvable:$true] %s967
      %970 = dma.vmem_to_hbm [thread:$0]  %s968, 64, %s22, [#allocation4]
    $region157: #{tpu_custom_call.1} parent=1 // pred_fallthru
      _
    // Predicated region
    $region158: #{tpu_custom_call.1} parent=1 // pred_check
      _
    $region159: #{tpu_custom_call.1} parent=1 // pred_check_branch
      %972 = sbr.rel (0) target = $region161
    $region160: #{tpu_custom_call.1} parent=1 // pred_region
      %973 = dma.done [#allocation4], 64
    $region161: #{tpu_custom_call.1} parent=1 // pred_fallthru
      _
    %974 = vsyncpa [#allocation3], 1
    %975 = vsyncpa [#allocation8], 1
    %976 = vsyncpa [#allocation11], 1
    %977 = vsyncpa [#allocation14], 1
    %978 = vsyncpa [#allocation17], 1
    %979 = vsyncpa [#allocation20], 1
    %980 = vsyncpa [#allocation23], 1
    %981 = vsyncpa [#allocation26], 1
    %982 = vsyncpa [#allocation4], 1
    %983 = vsyncpa [#allocation5], 1

// kernel: tpu_custom_call.1
$region0: #{tpu_custom_call.1}
  #allocation0 [shape = 'u32[]', space=smem, size = 0x4, offset = 0x4, fixed_abs, tag = 'smem constant byte address 0x4 - core index']
  #allocation1 [shape = 'u32[144,128]{1,0:T(1,128)}', space=vmem, size = 0x12000, scoped, tag = 'internal scratch']
  %s0 = inlined_call_operand.hbm [shape: f32[5], index: 0, kind: input, shape index: {}]
  %s1 = inlined_call_operand.hbm [shape: bf16[8,32], index: 1, kind: input, shape index: {}]
  %s2 = inlined_call_operand.hbm [shape: bf16[8,32], index: 2, kind: input, shape index: {}]
  %s3 = inlined_call_operand.hbm [shape: bf16[8,32], index: 3, kind: input, shape index: {}]
  %s4 = inlined_call_operand.hbm [shape: bf16[32,32], index: 4, kind: input, shape index: {}]
  %s5 = inlined_call_operand.hbm [shape: f32[1,32], index: 5, kind: input, shape index: {}]
  %s6 = inlined_call_operand.vmem [shape: bf16[32,32], index: 6, kind: input, shape index: {}]
  %s7 = inlined_call_operand.hbm [shape: f32[1,32], index: 7, kind: input, shape index: {}]
  %s8 = inlined_call_operand.hbm [shape: bf16[32,32], index: 8, kind: input, shape index: {}]
  %s9 = inlined_call_operand.hbm [shape: f32[1,32], index: 9, kind: input, shape index: {}]
  %s10 = inlined_call_operand.vmem [shape: bf16[32,32], index: 10, kind: input, shape index: {}]
  %s11 = inlined_call_operand.hbm [shape: f32[1,32], index: 11, kind: input, shape index: {}]
  %s12 = inlined_call_operand.hbm [shape: bf16[32,32], index: 12, kind: input, shape index: {}]
  %s13 = inlined_call_operand.hbm [shape: f32[1,32], index: 13, kind: input, shape index: {}]
  %s14 = inlined_call_operand.vmem [shape: bf16[32,32], index: 14, kind: input, shape index: {}]
  %s15 = inlined_call_operand.hbm [shape: f32[1,32], index: 15, kind: input, shape index: {}]
  %s16 = inlined_call_operand.hbm [shape: bf16[32,32], index: 16, kind: input, shape index: {}]
  %s17 = inlined_call_operand.vmem [shape: bf16[32,32], index: 17, kind: input, shape index: {}]
  %s18 = inlined_call_operand.hbm [shape: bf16[32,32], index: 18, kind: input, shape index: {}]
  %s19 = inlined_call_operand.vmem [shape: f32[1,32], index: 19, kind: input, shape index: {}]
  %s20 = inlined_call_operand.hbm [shape: bf16[32,128], index: 20, kind: input, shape index: {}]
  %s21 = inlined_call_operand.vmem [shape: f32[1,128], index: 21, kind: input, shape index: {}]
  %s22 = inlined_call_operand.hbm [shape: bf16[8,128], index: 22, kind: output, shape index: {}]
  %s23 = sld [smem:[#allocation0]]
  $region162: #{tpu_custom_call.1} parent=0
    _
  %s25 = ssub.s32 1, %s23
  %s26 = scalar_select 0, %s25, %s23
  $region1: #{tpu_custom_call.1} parent=0
    #allocation2 [shape = 'u8[512]{0}', space=smem, size = 0x200, scoped, tag = 'input window, operand 0, single buffered']
    #allocation3 [shape = 's32[1]{0}', space=sflag, size = 0x4, scoped, tag = 'scoped memory for tpu_custom_call.1']
    #allocation4 [shape = 's32[1]{0}', space=sflag, size = 0x4, scoped, tag = 'scoped memory for tpu_custom_call.1']
    #allocation5 [shape = 's32[1]{0}', space=sflag, size = 0x4, scoped, tag = 'scoped memory for tpu_custom_call.1']
    #allocation6 [shape = 'u8[2048]{0}', space=vmem, size = 0x800, scoped, tag = 'input window, operand 1, single buffered']
    #allocation7 [shape = 'u8[2048]{0}', space=vmem, size = 0x800, scoped, tag = 'input window, operand 2, single buffered']
    #allocation8 [shape = 's32[1]{0}', space=sflag, size = 0x4, scoped, tag = 'scoped memory for tpu_custom_call.1']
    #allocation9 [shape = 'u8[2048]{0}', space=vmem, size = 0x800, scoped, tag = 'input window, operand 3, single buffered']
    #allocation10 [shape = 'u8[8192]{0}', space=vmem, size = 0x2000, scoped, tag = 'input window, operand 4, single buffered']
    #allocation11 [shape = 's32[1]{0}', space=sflag, size = 0x4, scoped, tag = 'scoped memory for tpu_custom_call.1']
    #allocation12 [shape = 'u8[512]{0}', space=vmem, size = 0x400, scoped, tag = 'input window, operand 5, single buffered']
    #allocation13 [shape = 'u8[512]{0}', space=vmem, size = 0x400, scoped, tag = 'input window, operand 7, single buffered']
    #allocation14 [shape = 's32[1]{0}', space=sflag, size = 0x4, scoped, tag = 'scoped memory for tpu_custom_call.1']
    #allocation15 [shape = 'u8[8192]{0}', space=vmem, size = 0x2000, scoped, tag = 'input window, operand 8, single buffered']
    #allocation16 [shape = 'u8[512]{0}', space=vmem, size = 0x400, scoped, tag = 'input window, operand 9, single buffered']
    #allocation17 [shape = 's32[1]{0}', space=sflag, size = 0x4, scoped, tag = 'scoped memory for tpu_custom_call.1']
    #allocation18 [shape = 'u8[512]{0}', space=vmem, size = 0x400, scoped, tag = 'input window, operand 11, single buffered']
    #allocation19 [shape = 'u8[8192]{0}', space=vmem, size = 0x2000, scoped, tag = 'input window, operand 12, single buffered']
    #allocation20 [shape = 's32[1]{0}', space=sflag, size = 0x4, scoped, tag = 'scoped memory for tpu_custom_call.1']
    #allocation21 [shape = 'u8[512]{0}', space=vmem, size = 0x400, scoped, tag = 'input window, operand 13, single buffered']
    #allocation22 [shape = 'u8[512]{0}', space=vmem, size = 0x400, scoped, tag = 'input window, operand 15, single buffered']
    #allocation23 [shape = 's32[1]{0}', space=sflag, size = 0x4, scoped, tag = 'scoped memory for tpu_custom_call.1']
    #allocation24 [shape = 'u8[8192]{0}', space=vmem, size = 0x2000, scoped, tag = 'input window, operand 16, single buffered']
    #allocation25 [shape = 'u8[8192]{0}', space=vmem, size = 0x2000, scoped, tag = 'input window, operand 18, single buffered']
    #allocation26 [shape = 's32[1]{0}', space=sflag, size = 0x4, scoped, tag = 'scoped memory for tpu_custom_call.1']
    #allocation27 [shape = 'u8[8192]{0}', space=vmem, size = 0x2000, scoped, tag = 'input window, operand 20, single buffered']
    #allocation28 [shape = 'u8[2048]{0}', space=vmem, size = 0x800, scoped, tag = 'output window, operand 0, single buffered']
    %27 = vsyncpa [#allocation5], 0
    %28 = vsyncpa [#allocation3], 0
    %29 = vsyncpa [#allocation8], 0
    %30 = vsyncpa [#allocation11], 0
    %31 = vsyncpa [#allocation14], 0
    %32 = vsyncpa [#allocation17], 0
    %33 = vsyncpa [#allocation20], 0
    %34 = vsyncpa [#allocation23], 0
    %35 = vsyncpa [#allocation26], 0
    %36 = vsyncpa [#allocation4], 0
    // Predicated region
    $region2: #{tpu_custom_call.1} parent=1 // pred_check
      _
    $region3: #{tpu_custom_call.1} parent=1 // pred_check_branch
      %38 = sbr.rel (0) target = $region5
    $region4: #{tpu_custom_call.1} parent=1 // pred_region
      %s40 = ssub.s32 16, 16
      %41 = vsyncadd [#allocation5], %s40
      %44 = dma.hbm_to_smem %s0, 16, [#allocation2], [#allocation5]
    $region5: #{tpu_custom_call.1} parent=1 // pred_fallthru
      _
    // Predicated region
    $region6: #{tpu_custom_call.1} parent=1 // pred_check
      _
    $region7: #{tpu_custom_call.1} parent=1 // pred_check_branch
      %46 = sbr.rel (0) target = $region9
    $region8: #{tpu_custom_call.1} parent=1 // pred_region
      %s48 = ssub.s32 64, 64
      %49 = vsyncadd [#allocation3], %s48
      %s51 = sshll.u32 [#allocation6], 4
      %s52 = int_to_ptr.vmem [resolvable:$true] %s51
      %54 = dma.hbm_to_vmem [thread:$0]  %s1, 64, %s52, [#allocation3]
    $region9: #{tpu_custom_call.1} parent=1 // pred_fallthru
      _
    // Predicated region
    $region10: #{tpu_custom_call.1} parent=1 // pred_check
      _
    $region11: #{tpu_custom_call.1} parent=1 // pred_check_branch
      %56 = sbr.rel (0) target = $region13
    $region12: #{tpu_custom_call.1} parent=1 // pred_region
      %s58 = ssub.s32 64, 64
      %59 = vsyncadd [#allocation8], %s58
      %s61 = sshll.u32 [#allocation7], 4
      %s62 = int_to_ptr.vmem [resolvable:$true] %s61
      %64 = dma.hbm_to_vmem [thread:$0]  %s2, 64, %s62, [#allocation8]
    $region13: #{tpu_custom_call.1} parent=1 // pred_fallthru
      _
    // Predicated region
    $region14: #{tpu_custom_call.1} parent=1 // pred_check
      _
    $region15: #{tpu_custom_call.1} parent=1 // pred_check_branch
      %66 = sbr.rel (0) target = $region17
    $region16: #{tpu_custom_call.1} parent=1 // pred_region
      %s68 = ssub.s32 64, 64
      %69 = vsyncadd [#allocation8], %s68
      %s71 = sshll.u32 [#allocation9], 4
      %s72 = int_to_ptr.vmem [resolvable:$true] %s71
      %74 = dma.hbm_to_vmem [thread:$0]  %s3, 64, %s72, [#allocation8]
    $region17: #{tpu_custom_call.1} parent=1 // pred_fallthru
      _
    // Predicated region
    $region18: #{tpu_custom_call.1} parent=1 // pred_check
      _
    $region19: #{tpu_custom_call.1} parent=1 // pred_check_branch
      %76 = sbr.rel (0) target = $region21
    $region20: #{tpu_custom_call.1} parent=1 // pred_region
      %s78 = ssub.s32 256, 256
      %79 = vsyncadd [#allocation11], %s78
      %s80 = sshll.u32 [#allocation10], 4
      %s81 = int_to_ptr.vmem [resolvable:$true] %s80
      %86 = dma.hbm_to_vmem [thread:$0]  %s4, 256, %s81, [#allocation11], 64, 64, 4
    $region21: #{tpu_custom_call.1} parent=1 // pred_fallthru
      _
    // Predicated region
    $region22: #{tpu_custom_call.1} parent=1 // pred_check
      _
    $region23: #{tpu_custom_call.1} parent=1 // pred_check_branch
      %88 = sbr.rel (0) target = $region25
    $region24: #{tpu_custom_call.1} parent=1 // pred_region
      %s90 = ssub.s32 16, 16
      %91 = vsyncadd [#allocation11], %s90
      %s93 = sshll.u32 [#allocation12], 4
      %s94 = int_to_ptr.vmem [resolvable:$true] %s93
      %96 = dma.hbm_to_vmem [thread:$0]  %s5, 16, %s94, [#allocation11]
    $region25: #{tpu_custom_call.1} parent=1 // pred_fallthru
      _
    // Predicated region
    $region26: #{tpu_custom_call.1} parent=1 // pred_check
      _
    $region27: #{tpu_custom_call.1} parent=1 // pred_check_branch
      %98 = sbr.rel (0) target = $region29
    $region28: #{tpu_custom_call.1} parent=1 // pred_region
      _
    $region29: #{tpu_custom_call.1} parent=1 // pred_fallthru
      _
    // Predicated region
    $region30: #{tpu_custom_call.1} parent=1 // pred_check
      _
    $region31: #{tpu_custom_call.1} parent=1 // pred_check_branch
      %100 = sbr.rel (0) target = $region33
    $region32: #{tpu_custom_call.1} parent=1 // pred_region
      %s102 = ssub.s32 16, 16
      %103 = vsyncadd [#allocation14], %s102
      %s105 = sshll.u32 [#allocation13], 4
      %s106 = int_to_ptr.vmem [resolvable:$true] %s105
      %108 = dma.hbm_to_vmem [thread:$0]  %s7, 16, %s106, [#allocation14]
    $region33: #{tpu_custom_call.1} parent=1 // pred_fallthru
      _
    // Predicated region
    $region34: #{tpu_custom_call.1} parent=1 // pred_check
      _
    $region35: #{tpu_custom_call.1} parent=1 // pred_check_branch
      %110 = sbr.rel (0) target = $region37
    $region36: #{tpu_custom_call.1} parent=1 // pred_region
      %s112 = ssub.s32 256, 256
      %113 = vsyncadd [#allocation14], %s112
      %s114 = sshll.u32 [#allocation15], 4
      %s115 = int_to_ptr.vmem [resolvable:$true] %s114
      %120 = dma.hbm_to_vmem [thread:$0]  %s8, 256, %s115, [#allocation14], 64, 64, 4
    $region37: #{tpu_custom_call.1} parent=1 // pred_fallthru
      _
    // Predicated region
    $region38: #{tpu_custom_call.1} parent=1 // pred_check
      _
    $region39: #{tpu_custom_call.1} parent=1 // pred_check_branch
      %122 = sbr.rel (0) target = $region41
    $region40: #{tpu_custom_call.1} parent=1 // pred_region
      %s124 = ssub.s32 16, 16
      %125 = vsyncadd [#allocation17], %s124
      %s127 = sshll.u32 [#allocation16], 4
      %s128 = int_to_ptr.vmem [resolvable:$true] %s127
      %130 = dma.hbm_to_vmem [thread:$0]  %s9, 16, %s128, [#allocation17]
    $region41: #{tpu_custom_call.1} parent=1 // pred_fallthru
      _
    // Predicated region
    $region42: #{tpu_custom_call.1} parent=1 // pred_check
      _
    $region43: #{tpu_custom_call.1} parent=1 // pred_check_branch
      %132 = sbr.rel (0) target = $region45
    $region44: #{tpu_custom_call.1} parent=1 // pred_region
      _
    $region45: #{tpu_custom_call.1} parent=1 // pred_fallthru
      _
    // Predicated region
    $region46: #{tpu_custom_call.1} parent=1 // pred_check
      _
    $region47: #{tpu_custom_call.1} parent=1 // pred_check_branch
      %134 = sbr.rel (0) target = $region49
    $region48: #{tpu_custom_call.1} parent=1 // pred_region
      %s136 = ssub.s32 16, 16
      %137 = vsyncadd [#allocation17], %s136
      %s139 = sshll.u32 [#allocation18], 4
      %s140 = int_to_ptr.vmem [resolvable:$true] %s139
      %142 = dma.hbm_to_vmem [thread:$0]  %s11, 16, %s140, [#allocation17]
    $region49: #{tpu_custom_call.1} parent=1 // pred_fallthru
      _
    // Predicated region
    $region50: #{tpu_custom_call.1} parent=1 // pred_check
      _
    $region51: #{tpu_custom_call.1} parent=1 // pred_check_branch
      %144 = sbr.rel (0) target = $region53
    $region52: #{tpu_custom_call.1} parent=1 // pred_region
      %s146 = ssub.s32 256, 256
      %147 = vsyncadd [#allocation20], %s146
      %s148 = sshll.u32 [#allocation19], 4
      %s149 = int_to_ptr.vmem [resolvable:$true] %s148
      %154 = dma.hbm_to_vmem [thread:$0]  %s12, 256, %s149, [#allocation20], 64, 64, 4
    $region53: #{tpu_custom_call.1} parent=1 // pred_fallthru
      _
    // Predicated region
    $region54: #{tpu_custom_call.1} parent=1 // pred_check
      _
    $region55: #{tpu_custom_call.1} parent=1 // pred_check_branch
      %156 = sbr.rel (0) target = $region57
    $region56: #{tpu_custom_call.1} parent=1 // pred_region
      %s158 = ssub.s32 16, 16
      %159 = vsyncadd [#allocation20], %s158
      %s161 = sshll.u32 [#allocation21], 4
      %s162 = int_to_ptr.vmem [resolvable:$true] %s161
      %164 = dma.hbm_to_vmem [thread:$0]  %s13, 16, %s162, [#allocation20]
    $region57: #{tpu_custom_call.1} parent=1 // pred_fallthru
      _
    // Predicated region
    $region58: #{tpu_custom_call.1} parent=1 // pred_check
      _
    $region59: #{tpu_custom_call.1} parent=1 // pred_check_branch
      %166 = sbr.rel (0) target = $region61
    $region60: #{tpu_custom_call.1} parent=1 // pred_region
      _
    $region61: #{tpu_custom_call.1} parent=1 // pred_fallthru
      _
    // Predicated region
    $region62: #{tpu_custom_call.1} parent=1 // pred_check
      _
    $region63: #{tpu_custom_call.1} parent=1 // pred_check_branch
      %168 = sbr.rel (0) target = $region65
    $region64: #{tpu_custom_call.1} parent=1 // pred_region
      %s170 = ssub.s32 16, 16
      %171 = vsyncadd [#allocation23], %s170
      %s173 = sshll.u32 [#allocation22], 4
      %s174 = int_to_ptr.vmem [resolvable:$true] %s173
      %176 = dma.hbm_to_vmem [thread:$0]  %s15, 16, %s174, [#allocation23]
    $region65: #{tpu_custom_call.1} parent=1 // pred_fallthru
      _
    // Predicated region
    $region66: #{tpu_custom_call.1} parent=1 // pred_check
      _
    $region67: #{tpu_custom_call.1} parent=1 // pred_check_branch
      %178 = sbr.rel (0) target = $region69
    $region68: #{tpu_custom_call.1} parent=1 // pred_region
      %s180 = ssub.s32 256, 256
      %181 = vsyncadd [#allocation23], %s180
      %s182 = sshll.u32 [#allocation24], 4
      %s183 = int_to_ptr.vmem [resolvable:$true] %s182
      %188 = dma.hbm_to_vmem [thread:$0]  %s16, 256, %s183, [#allocation23], 64, 64, 4
    $region69: #{tpu_custom_call.1} parent=1 // pred_fallthru
      _
    // Predicated region
    $region70: #{tpu_custom_call.1} parent=1 // pred_check
      _
    $region71: #{tpu_custom_call.1} parent=1 // pred_check_branch
      %190 = sbr.rel (0) target = $region73
    $region72: #{tpu_custom_call.1} parent=1 // pred_region
      _
    $region73: #{tpu_custom_call.1} parent=1 // pred_fallthru
      _
    // Predicated region
    $region74: #{tpu_custom_call.1} parent=1 // pred_check
      _
    $region75: #{tpu_custom_call.1} parent=1 // pred_check_branch
      %192 = sbr.rel (0) target = $region77
    $region76: #{tpu_custom_call.1} parent=1 // pred_region
      %s194 = ssub.s32 256, 256
      %195 = vsyncadd [#allocation26], %s194
      %s196 = sshll.u32 [#allocation25], 4
      %s197 = int_to_ptr.vmem [resolvable:$true] %s196
      %202 = dma.hbm_to_vmem [thread:$0]  %s18, 256, %s197, [#allocation26], 64, 64, 4
    $region77: #{tpu_custom_call.1} parent=1 // pred_fallthru
      _
    // Predicated region
    $region78: #{tpu_custom_call.1} parent=1 // pred_check
      _
    $region79: #{tpu_custom_call.1} parent=1 // pred_check_branch
      %204 = sbr.rel (0) target = $region81
    $region80: #{tpu_custom_call.1} parent=1 // pred_region
      _
    $region81: #{tpu_custom_call.1} parent=1 // pred_fallthru
      _
    // Predicated region
    $region82: #{tpu_custom_call.1} parent=1 // pred_check
      _
    $region83: #{tpu_custom_call.1} parent=1 // pred_check_branch
      %206 = sbr.rel (0) target = $region85
    $region84: #{tpu_custom_call.1} parent=1 // pred_region
      %s208 = ssub.s32 256, 256
      %209 = vsyncadd [#allocation26], %s208
      %s210 = sshll.u32 [#allocation27], 4
      %s211 = int_to_ptr.vmem [resolvable:$true] %s210
      %216 = dma.hbm_to_vmem [thread:$0]  %s20, 256, %s211, [#allocation26], 64, 64, 4
    $region85: #{tpu_custom_call.1} parent=1 // pred_fallthru
      _
    // Predicated region
    $region86: #{tpu_custom_call.1} parent=1 // pred_check
      _
    $region87: #{tpu_custom_call.1} parent=1 // pred_check_branch
      %218 = sbr.rel (0) target = $region89
    $region88: #{tpu_custom_call.1} parent=1 // pred_region
      _
    $region89: #{tpu_custom_call.1} parent=1 // pred_fallthru
      _
    // Predicated region
    $region90: #{tpu_custom_call.1} parent=1 // pred_check
      _
    $region91: #{tpu_custom_call.1} parent=1 // pred_check_branch
      %220 = sbr.rel (0) target = $region93
    $region92: #{tpu_custom_call.1} parent=1 // pred_region
      %221 = dma.done [#allocation5], 16
    $region93: #{tpu_custom_call.1} parent=1 // pred_fallthru
      _
    // Predicated region
    $region94: #{tpu_custom_call.1} parent=1 // pred_check
      _
    $region95: #{tpu_custom_call.1} parent=1 // pred_check_branch
      %223 = sbr.rel (0) target = $region97
    $region96: #{tpu_custom_call.1} parent=1 // pred_region
      %224 = dma.done [#allocation3], 64
    $region97: #{tpu_custom_call.1} parent=1 // pred_fallthru
      _
    // Predicated region
    $region98: #{tpu_custom_call.1} parent=1 // pred_check
      _
    $region99: #{tpu_custom_call.1} parent=1 // pred_check_branch
      %226 = sbr.rel (0) target = $region101
    $region100: #{tpu_custom_call.1} parent=1 // pred_region
      %227 = dma.done [#allocation8], 64
    $region101: #{tpu_custom_call.1} parent=1 // pred_fallthru
      _
    // Predicated region
    $region102: #{tpu_custom_call.1} parent=1 // pred_check
      _
    $region103: #{tpu_custom_call.1} parent=1 // pred_check_branch
      %229 = sbr.rel (0) target = $region105
    $region104: #{tpu_custom_call.1} parent=1 // pred_region
      %230 = dma.done [#allocation8], 64
    $region105: #{tpu_custom_call.1} parent=1 // pred_fallthru
      _
    // Predicated region
    $region106: #{tpu_custom_call.1} parent=1 // pred_check
      _
    $region107: #{tpu_custom_call.1} parent=1 // pred_check_branch
      %232 = sbr.rel (0) target = $region109
    $region108: #{tpu_custom_call.1} parent=1 // pred_region
      %233 = dma.done [#allocation11], 256
    $region109: #{tpu_custom_call.1} parent=1 // pred_fallthru
      _
    // Predicated region
    $region110: #{tpu_custom_call.1} parent=1 // pred_check
      _
    $region111: #{tpu_custom_call.1} parent=1 // pred_check_branch
      %235 = sbr.rel (0) target = $region113
    $region112: #{tpu_custom_call.1} parent=1 // pred_region
      %236 = dma.done [#allocation11], 16
    $region113: #{tpu_custom_call.1} parent=1 // pred_fallthru
      _
    // Predicated region
    $region114: #{tpu_custom_call.1} parent=1 // pred_check
      _
    $region115: #{tpu_custom_call.1} parent=1 // pred_check_branch
      %238 = sbr.rel (0) target = $region117
    $region116: #{tpu_custom_call.1} parent=1 // pred_region
      %239 = dma.done [#allocation14], 16
    $region117: #{tpu_custom_call.1} parent=1 // pred_fallthru
      _
    // Predicated region
    $region118: #{tpu_custom_call.1} parent=1 // pred_check
      _
    $region119: #{tpu_custom_call.1} parent=1 // pred_check_branch
      %241 = sbr.rel (0) target = $region121
    $region120: #{tpu_custom_call.1} parent=1 // pred_region
      %242 = dma.done [#allocation14], 256
    $region121: #{tpu_custom_call.1} parent=1 // pred_fallthru
      _
    // Predicated region
    $region122: #{tpu_custom_call.1} parent=1 // pred_check
      _
    $region123: #{tpu_custom_call.1} parent=1 // pred_check_branch
      %244 = sbr.rel (0) target = $region125
    $region124: #{tpu_custom_call.1} parent=1 // pred_region
      %245 = dma.done [#allocation17], 16
    $region125: #{tpu_custom_call.1} parent=1 // pred_fallthru
      _
    // Predicated region
    $region126: #{tpu_custom_call.1} parent=1 // pred_check
      _
    $region127: #{tpu_custom_call.1} parent=1 // pred_check_branch
      %247 = sbr.rel (0) target = $region129
    $region128: #{tpu_custom_call.1} parent=1 // pred_region
      %248 = dma.done [#allocation17], 16
    $region129: #{tpu_custom_call.1} parent=1 // pred_fallthru
      _
    // Predicated region
    $region130: #{tpu_custom_call.1} parent=1 // pred_check
      _
    $region131: #{tpu_custom_call.1} parent=1 // pred_check_branch
      %250 = sbr.rel (0) target = $region133
    $region132: #{tpu_custom_call.1} parent=1 // pred_region
      %251 = dma.done [#allocation20], 256
    $region133: #{tpu_custom_call.1} parent=1 // pred_fallthru
      _
    // Predicated region
    $region134: #{tpu_custom_call.1} parent=1 // pred_check
      _
    $region135: #{tpu_custom_call.1} parent=1 // pred_check_branch
      %253 = sbr.rel (0) target = $region137
    $region136: #{tpu_custom_call.1} parent=1 // pred_region
      %254 = dma.done [#allocation20], 16
    $region137: #{tpu_custom_call.1} parent=1 // pred_fallthru
      _
    // Predicated region
    $region138: #{tpu_custom_call.1} parent=1 // pred_check
      _
    $region139: #{tpu_custom_call.1} parent=1 // pred_check_branch
      %256 = sbr.rel (0) target = $region141
    $region140: #{tpu_custom_call.1} parent=1 // pred_region
      %257 = dma.done [#allocation23], 16
    $region141: #{tpu_custom_call.1} parent=1 // pred_fallthru
      _
    // Predicated region
    $region142: #{tpu_custom_call.1} parent=1 // pred_check
      _
    $region143: #{tpu_custom_call.1} parent=1 // pred_check_branch
      %259 = sbr.rel (0) target = $region145
    $region144: #{tpu_custom_call.1} parent=1 // pred_region
      %260 = dma.done [#allocation23], 256
    $region145: #{tpu_custom_call.1} parent=1 // pred_fallthru
      _
    // Predicated region
    $region146: #{tpu_custom_call.1} parent=1 // pred_check
      _
    $region147: #{tpu_custom_call.1} parent=1 // pred_check_branch
      %262 = sbr.rel (0) target = $region149
    $region148: #{tpu_custom_call.1} parent=1 // pred_region
      %263 = dma.done [#allocation26], 256
    $region149: #{tpu_custom_call.1} parent=1 // pred_fallthru
      _
    // Predicated region
    $region150: #{tpu_custom_call.1} parent=1 // pred_check
      _
    $region151: #{tpu_custom_call.1} parent=1 // pred_check_branch
      %265 = sbr.rel (0) target = $region153
    $region152: #{tpu_custom_call.1} parent=1 // pred_region
      %266 = dma.done [#allocation26], 256
    $region153: #{tpu_custom_call.1} parent=1 // pred_fallthru
      _
    %267 = sfence
    %v269 = vld [vmem:[#allocation6] sm:$0xf]
    %v270 = vld [vmem:[#allocation10] sm:$0xf]
    %v271 = vld [vmem:[#allocation10 + $0x4] sm:$0xf]
    %v272 = vld [vmem:[#allocation10 + $0x8] sm:$0xf]
    %v273 = vld [vmem:[#allocation10 + $0xc] sm:$0xf]
    %v274 = vld [vmem:[#allocation12] sm:$0x1]
    %v276 = vlaneseq
    %v277 = vshrl.u32 %v276, 7
    %v278 = vsub.s32 0, %v277
    %v279 = vrot.slane %v274, %v278
    %v285 = vunpack.c.l.b16 %v270
    %v286 = vunpack.c.l.b16 %v271
    %v287 = vunpack.c.l.b16 %v272
    %v288 = vunpack.c.l.b16 %v273
    %v289 = vpack.c.b16 %v286, %v285
    %v290 = vpack.c.b16 %v288, %v287
    %vm293 = vcmask 261120
    %v295 = vsel %vm293, %v269, 0
    %297 = vmatprep.subr.bf16.mxu0 0
    %298 = vmatpush1.bf16.msra.mxu0 %v289
    %299 = vmatprep.subr.bf16.mxu0 0
    %300 = vmatpush1.bf16.msra.mxu0 %v290
    %301 = vmatprep.subr.bf16.mxu0 0
    %302 = vmatpush1.bf16.msra.mxu0 0
    %303 = vmatprep.subr.bf16.mxu0 0
    %304 = vmatpush1.bf16.msra.mxu0 0
    %305 = vmatprep.subr.bf16.mxu0 0
    %306 = vmatpush1.bf16.msra.mxu0 0
    %307 = vmatprep.subr.bf16.mxu0 0
    %308 = vmatpush1.bf16.msra.mxu0 0
    %309 = vmatprep.subr.bf16.mxu0 0
    %310 = vmatpush1.bf16.msra.mxu0 0
    %311 = vmatprep.subr.bf16.mxu0 0
    %312 = vmatpush1.bf16.msra.mxu0 0
    %313 = vmatprep.subr.bf16.mxu0 0
    %314 = vmatpush1.bf16.msra.mxu0 0
    %315 = vmatprep.subr.bf16.mxu0 0
    %316 = vmatpush1.bf16.msra.mxu0 0
    %317 = vmatprep.subr.bf16.mxu0 0
    %318 = vmatpush1.bf16.msra.mxu0 0
    %319 = vmatprep.subr.bf16.mxu0 0
    %320 = vmatpush1.bf16.msra.mxu0 0
    %321 = vmatprep.subr.bf16.mxu0 0
    %322 = vmatpush1.bf16.msra.mxu0 0
    %323 = vmatprep.subr.bf16.mxu0 0
    %324 = vmatpush1.bf16.msra.mxu0 0
    %325 = vmatprep.subr.bf16.mxu0 0
    %326 = vmatpush1.bf16.msra.mxu0 0
    %327 = vmatprep.subr.bf16.mxu0 0
    %328 = vmatpush1.bf16.msra.mxu0 0
    %329 = vmatprep.mubr.bf16.mxu0 0
    %330 = vmatmul.mubr.bf16.gmra.mrb[0].mxu0 %v295
    %v331 = vpop.f32.mrb[0].mxu0
    %v332 = vadd.f32 %v279, %v331
    %v333 = vpop.f32.mrb[0].mxu0
    %v334 = vpop.f32.mrb[0].mxu0
    %v335 = vpop.f32.mrb[0].mxu0
    %336 = vdwg.mxu0
    %s337 = sld [smem:[#allocation2]]
    %vm338 = vcmp.gt.f32.partialorder %v332, 0.0
    %v339 = vstv %s337
    %v340 = vmul.f32 %v339, %v332
    %v341 = vsel %vm338, %v332, %v340
    %v342 = vpack.c.bf16 %v341, %v341
    %v343 = vld [vmem:[%s6] sm:$0xf]
    %v344 = vld [vmem:[%s6 + $0x4] sm:$0xf]
    %v345 = vld [vmem:[%s6 + $0x8] sm:$0xf]
    %v346 = vld [vmem:[%s6 + $0xc] sm:$0xf]
    %v347 = vld [vmem:[#allocation13] sm:$0x1]
    %v349 = vlaneseq
    %v350 = vshrl.u32 %v349, 7
    %v351 = vsub.s32 0, %v350
    %v352 = vrot.slane %v347, %v351
    %v358 = vunpack.c.l.b16 %v343
    %v359 = vunpack.c.l.b16 %v344
    %v360 = vunpack.c.l.b16 %v345
    %v361 = vunpack.c.l.b16 %v346
    %v362 = vpack.c.b16 %v359, %v358
    %v363 = vpack.c.b16 %v361, %v360
    %v367 = vsel %vm293, %v342, 0
    %369 = vmatprep.subr.bf16.mxu0 0
    %370 = vmatpush1.bf16.msra.mxu0 %v362
    %371 = vmatprep.subr.bf16.mxu0 0
    %372 = vmatpush1.bf16.msra.mxu0 %v363
    %373 = vmatprep.subr.bf16.mxu0 0
    %374 = vmatpush1.bf16.msra.mxu0 0
    %375 = vmatprep.subr.bf16.mxu0 0
    %376 = vmatpush1.bf16.msra.mxu0 0
    %377 = vmatprep.subr.bf16.mxu0 0
    %378 = vmatpush1.bf16.msra.mxu0 0
    %379 = vmatprep.subr.bf16.mxu0 0
    %380 = vmatpush1.bf16.msra.mxu0 0
    %381 = vmatprep.subr.bf16.mxu0 0
    %382 = vmatpush1.bf16.msra.mxu0 0
    %383 = vmatprep.subr.bf16.mxu0 0
    %384 = vmatpush1.bf16.msra.mxu0 0
    %385 = vmatprep.subr.bf16.mxu0 0
    %386 = vmatpush1.bf16.msra.mxu0 0
    %387 = vmatprep.subr.bf16.mxu0 0
    %388 = vmatpush1.bf16.msra.mxu0 0
    %389 = vmatprep.subr.bf16.mxu0 0
    %390 = vmatpush1.bf16.msra.mxu0 0
    %391 = vmatprep.subr.bf16.mxu0 0
    %392 = vmatpush1.bf16.msra.mxu0 0
    %393 = vmatprep.subr.bf16.mxu0 0
    %394 = vmatpush1.bf16.msra.mxu0 0
    %395 = vmatprep.subr.bf16.mxu0 0
    %396 = vmatpush1.bf16.msra.mxu0 0
    %397 = vmatprep.subr.bf16.mxu0 0
    %398 = vmatpush1.bf16.msra.mxu0 0
    %399 = vmatprep.subr.bf16.mxu0 0
    %400 = vmatpush1.bf16.msra.mxu0 0
    %401 = vmatprep.mubr.bf16.mxu0 0
    %402 = vmatmul.mubr.bf16.gmra.mrb[0].mxu0 %v367
    %v403 = vpop.f32.mrb[0].mxu0
    %v404 = vadd.f32 %v352, %v403
    %v405 = vpop.f32.mrb[0].mxu0
    %v406 = vpop.f32.mrb[0].mxu0
    %v407 = vpop.f32.mrb[0].mxu0
    %408 = vdwg.mxu0
    %s409 = sld [smem:[#allocation2 + $0x3]]
    %vm410 = vcmp.gt.f32.partialorder %v404, 0.0
    %v411 = vstv %s409
    %v412 = vmul.f32 %v411, %v404
    %v413 = vsel %vm410, %v404, %v412
    %v414 = vpack.c.bf16 %v413, %v413
    %v415 = vld [vmem:[#allocation24] sm:$0xf]
    %v416 = vld [vmem:[#allocation24 + $0x4] sm:$0xf]
    %v417 = vld [vmem:[#allocation24 + $0x8] sm:$0xf]
    %v418 = vld [vmem:[#allocation24 + $0xc] sm:$0xf]
    %v419 = vld [vmem:[#allocation7] sm:$0xf]
    %v420 = vld [vmem:[#allocation15] sm:$0xf]
    %v421 = vld [vmem:[#allocation15 + $0x4] sm:$0xf]
    %v422 = vld [vmem:[#allocation15 + $0x8] sm:$0xf]
    %v423 = vld [vmem:[#allocation15 + $0xc] sm:$0xf]
    %v424 = vld [vmem:[#allocation16] sm:$0x1]
    %v426 = vlaneseq
    %v427 = vshrl.u32 %v426, 7
    %v428 = vsub.s32 0, %v427
    %v429 = vrot.slane %v424, %v428
    %v435 = vunpack.c.l.b16 %v420
    %v436 = vunpack.c.l.b16 %v421
    %v437 = vunpack.c.l.b16 %v422
    %v438 = vunpack.c.l.b16 %v423
    %v439 = vpack.c.b16 %v436, %v435
    %v440 = vpack.c.b16 %v438, %v437
    %v444 = vsel %vm293, %v419, 0
    %446 = vmatprep.subr.bf16.mxu0 0
    %447 = vmatpush1.bf16.msra.mxu0 %v439
    %448 = vmatprep.subr.bf16.mxu0 0
    %449 = vmatpush1.bf16.msra.mxu0 %v440
    %450 = vmatprep.subr.bf16.mxu0 0
    %451 = vmatpush1.bf16.msra.mxu0 0
    %452 = vmatprep.subr.bf16.mxu0 0
    %453 = vmatpush1.bf16.msra.mxu0 0
    %454 = vmatprep.subr.bf16.mxu0 0
    %455 = vmatpush1.bf16.msra.mxu0 0
    %456 = vmatprep.subr.bf16.mxu0 0
    %457 = vmatpush1.bf16.msra.mxu0 0
    %458 = vmatprep.subr.bf16.mxu0 0
    %459 = vmatpush1.bf16.msra.mxu0 0
    %460 = vmatprep.subr.bf16.mxu0 0
    %461 = vmatpush1.bf16.msra.mxu0 0
    %462 = vmatprep.subr.bf16.mxu0 0
    %463 = vmatpush1.bf16.msra.mxu0 0
    %464 = vmatprep.subr.bf16.mxu0 0
    %465 = vmatpush1.bf16.msra.mxu0 0
    %466 = vmatprep.subr.bf16.mxu0 0
    %467 = vmatpush1.bf16.msra.mxu0 0
    %468 = vmatprep.subr.bf16.mxu0 0
    %469 = vmatpush1.bf16.msra.mxu0 0
    %470 = vmatprep.subr.bf16.mxu0 0
    %471 = vmatpush1.bf16.msra.mxu0 0
    %472 = vmatprep.subr.bf16.mxu0 0
    %473 = vmatpush1.bf16.msra.mxu0 0
    %474 = vmatprep.subr.bf16.mxu0 0
    %475 = vmatpush1.bf16.msra.mxu0 0
    %476 = vmatprep.subr.bf16.mxu0 0
    %477 = vmatpush1.bf16.msra.mxu0 0
    %478 = vmatprep.mubr.bf16.mxu0 0
    %479 = vmatmul.mubr.bf16.gmra.mrb[0].mxu0 %v444
    %v480 = vpop.f32.mrb[0].mxu0
    %v481 = vadd.f32 %v429, %v480
    %v482 = vpop.f32.mrb[0].mxu0
    %v483 = vpop.f32.mrb[0].mxu0
    %v484 = vpop.f32.mrb[0].mxu0
    %485 = vdwg.mxu0
    %s486 = sld [smem:[#allocation2 + $0x1]]
    %vm487 = vcmp.gt.f32.partialorder %v481, 0.0
    %v488 = vstv %s486
    %v489 = vmul.f32 %v488, %v481
    %v490 = vsel %vm487, %v481, %v489
    %v491 = vpack.c.bf16 %v490, %v490
    %v492 = vld [vmem:[%s10] sm:$0xf]
    %v493 = vld [vmem:[%s10 + $0x4] sm:$0xf]
    %v494 = vld [vmem:[%s10 + $0x8] sm:$0xf]
    %v495 = vld [vmem:[%s10 + $0xc] sm:$0xf]
    %v496 = vld [vmem:[#allocation18] sm:$0x1]
    %v498 = vlaneseq
    %v499 = vshrl.u32 %v498, 7
    %v500 = vsub.s32 0, %v499
    %v501 = vrot.slane %v496, %v500
    %v507 = vunpack.c.l.b16 %v492
    %v508 = vunpack.c.l.b16 %v493
    %v509 = vunpack.c.l.b16 %v494
    %v510 = vunpack.c.l.b16 %v495
    %v511 = vpack.c.b16 %v508, %v507
    %v512 = vpack.c.b16 %v510, %v509
    %v516 = vsel %vm293, %v491, 0
    %518 = vmatprep.subr.bf16.mxu0 0
    %519 = vmatpush1.bf16.msra.mxu0 %v511
    %520 = vmatprep.subr.bf16.mxu0 0
    %521 = vmatpush1.bf16.msra.mxu0 %v512
    %522 = vmatprep.subr.bf16.mxu0 0
    %523 = vmatpush1.bf16.msra.mxu0 0
    %524 = vmatprep.subr.bf16.mxu0 0
    %525 = vmatpush1.bf16.msra.mxu0 0
    %526 = vmatprep.subr.bf16.mxu0 0
    %527 = vmatpush1.bf16.msra.mxu0 0
    %528 = vmatprep.subr.bf16.mxu0 0
    %529 = vmatpush1.bf16.msra.mxu0 0
    %530 = vmatprep.subr.bf16.mxu0 0
    %531 = vmatpush1.bf16.msra.mxu0 0
    %532 = vmatprep.subr.bf16.mxu0 0
    %533 = vmatpush1.bf16.msra.mxu0 0
    %534 = vmatprep.subr.bf16.mxu0 0
    %535 = vmatpush1.bf16.msra.mxu0 0
    %536 = vmatprep.subr.bf16.mxu0 0
    %537 = vmatpush1.bf16.msra.mxu0 0
    %538 = vmatprep.subr.bf16.mxu0 0
    %539 = vmatpush1.bf16.msra.mxu0 0
    %540 = vmatprep.subr.bf16.mxu0 0
    %541 = vmatpush1.bf16.msra.mxu0 0
    %542 = vmatprep.subr.bf16.mxu0 0
    %543 = vmatpush1.bf16.msra.mxu0 0
    %544 = vmatprep.subr.bf16.mxu0 0
    %545 = vmatpush1.bf16.msra.mxu0 0
    %546 = vmatprep.subr.bf16.mxu0 0
    %547 = vmatpush1.bf16.msra.mxu0 0
    %548 = vmatprep.subr.bf16.mxu0 0
    %549 = vmatpush1.bf16.msra.mxu0 0
    %550 = vmatprep.mubr.bf16.mxu0 0
    %551 = vmatmul.mubr.bf16.gmra.mrb[0].mxu0 %v516
    %v552 = vpop.f32.mrb[0].mxu0
    %v553 = vadd.f32 %v501, %v552
    %v554 = vpop.f32.mrb[0].mxu0
    %v555 = vpop.f32.mrb[0].mxu0
    %v556 = vpop.f32.mrb[0].mxu0
    %557 = vdwg.mxu0
    %vm558 = vcmp.gt.f32.partialorder %v553, 0.0
    %v559 = vmul.f32 %v411, %v553
    %v560 = vsel %vm558, %v553, %v559
    %v561 = vpack.c.bf16 %v560, %v560
    %v562 = vld [vmem:[%s17] sm:$0xf]
    %v563 = vld [vmem:[%s17 + $0x4] sm:$0xf]
    %v564 = vld [vmem:[%s17 + $0x8] sm:$0xf]
    %v565 = vld [vmem:[%s17 + $0xc] sm:$0xf]
    %v570 = vunpack.c.l.b16 %v562
    %v571 = vunpack.c.l.b16 %v563
    %v572 = vunpack.c.l.b16 %v564
    %v573 = vunpack.c.l.b16 %v565
    %v574 = vpack.c.b16 %v571, %v570
    %v575 = vpack.c.b16 %v573, %v572
    %v579 = vsel %vm293, %v561, 0
    %581 = vmatprep.subr.bf16.mxu0 0
    %582 = vmatpush1.bf16.msra.mxu0 %v574
    %583 = vmatprep.subr.bf16.mxu0 0
    %584 = vmatpush1.bf16.msra.mxu0 %v575
    %585 = vmatprep.subr.bf16.mxu0 0
    %586 = vmatpush1.bf16.msra.mxu0 0
    %587 = vmatprep.subr.bf16.mxu0 0
    %588 = vmatpush1.bf16.msra.mxu0 0
    %589 = vmatprep.subr.bf16.mxu0 0
    %590 = vmatpush1.bf16.msra.mxu0 0
    %591 = vmatprep.subr.bf16.mxu0 0
    %592 = vmatpush1.bf16.msra.mxu0 0
    %593 = vmatprep.subr.bf16.mxu0 0
    %594 = vmatpush1.bf16.msra.mxu0 0
    %595 = vmatprep.subr.bf16.mxu0 0
    %596 = vmatpush1.bf16.msra.mxu0 0
    %597 = vmatprep.subr.bf16.mxu0 0
    %598 = vmatpush1.bf16.msra.mxu0 0
    %599 = vmatprep.subr.bf16.mxu0 0
    %600 = vmatpush1.bf16.msra.mxu0 0
    %601 = vmatprep.subr.bf16.mxu0 0
    %602 = vmatpush1.bf16.msra.mxu0 0
    %603 = vmatprep.subr.bf16.mxu0 0
    %604 = vmatpush1.bf16.msra.mxu0 0
    %605 = vmatprep.subr.bf16.mxu0 0
    %606 = vmatpush1.bf16.msra.mxu0 0
    %607 = vmatprep.subr.bf16.mxu0 0
    %608 = vmatpush1.bf16.msra.mxu0 0
    %609 = vmatprep.subr.bf16.mxu0 0
    %610 = vmatpush1.bf16.msra.mxu0 0
    %611 = vmatprep.subr.bf16.mxu0 0
    %612 = vmatpush1.bf16.msra.mxu0 0
    %613 = vmatprep.mubr.bf16.mxu0 0
    %614 = vmatmul.mubr.bf16.gmra.mrb[0].mxu0 %v579
    %v615 = vpop.f32.mrb[0].mxu0
    %v616 = vadd.f32 0.0, %v615
    %v617 = vpop.f32.mrb[0].mxu0
    %v618 = vpop.f32.mrb[0].mxu0
    %v619 = vpop.f32.mrb[0].mxu0
    %620 = vdwg.mxu0
    %v625 = vunpack.c.l.b16 %v415
    %v626 = vunpack.c.l.b16 %v416
    %v627 = vunpack.c.l.b16 %v417
    %v628 = vunpack.c.l.b16 %v418
    %v629 = vpack.c.b16 %v626, %v625
    %v630 = vpack.c.b16 %v628, %v627
    %v634 = vsel %vm293, %v414, 0
    %636 = vmatprep.subr.bf16.mxu0 0
    %637 = vmatpush1.bf16.msra.mxu0 %v629
    %638 = vmatprep.subr.bf16.mxu0 0
    %639 = vmatpush1.bf16.msra.mxu0 %v630
    %640 = vmatprep.subr.bf16.mxu0 0
    %641 = vmatpush1.bf16.msra.mxu0 0
    %642 = vmatprep.subr.bf16.mxu0 0
    %643 = vmatpush1.bf16.msra.mxu0 0
    %644 = vmatprep.subr.bf16.mxu0 0
    %645 = vmatpush1.bf16.msra.mxu0 0
    %646 = vmatprep.subr.bf16.mxu0 0
    %647 = vmatpush1.bf16.msra.mxu0 0
    %648 = vmatprep.subr.bf16.mxu0 0
    %649 = vmatpush1.bf16.msra.mxu0 0
    %650 = vmatprep.subr.bf16.mxu0 0
    %651 = vmatpush1.bf16.msra.mxu0 0
    %652 = vmatprep.subr.bf16.mxu0 0
    %653 = vmatpush1.bf16.msra.mxu0 0
    %654 = vmatprep.subr.bf16.mxu0 0
    %655 = vmatpush1.bf16.msra.mxu0 0
    %656 = vmatprep.subr.bf16.mxu0 0
    %657 = vmatpush1.bf16.msra.mxu0 0
    %658 = vmatprep.subr.bf16.mxu0 0
    %659 = vmatpush1.bf16.msra.mxu0 0
    %660 = vmatprep.subr.bf16.mxu0 0
    %661 = vmatpush1.bf16.msra.mxu0 0
    %662 = vmatprep.subr.bf16.mxu0 0
    %663 = vmatpush1.bf16.msra.mxu0 0
    %664 = vmatprep.subr.bf16.mxu0 0
    %665 = vmatpush1.bf16.msra.mxu0 0
    %666 = vmatprep.subr.bf16.mxu0 0
    %667 = vmatpush1.bf16.msra.mxu0 0
    %668 = vmatprep.mubr.bf16.mxu0 0
    %669 = vmatmul.mubr.bf16.gmra.mrb[0].mxu0 %v634
    %v670 = vpop.f32.mrb[0].mxu0
    %v671 = vadd.f32 %v616, %v670
    %v672 = vpop.f32.mrb[0].mxu0
    %v673 = vpop.f32.mrb[0].mxu0
    %v674 = vpop.f32.mrb[0].mxu0
    %675 = vdwg.mxu0
    %v676 = vld [vmem:[#allocation9] sm:$0xf]
    %v677 = vld [vmem:[#allocation19] sm:$0xf]
    %v678 = vld [vmem:[#allocation19 + $0x4] sm:$0xf]
    %v679 = vld [vmem:[#allocation19 + $0x8] sm:$0xf]
    %v680 = vld [vmem:[#allocation19 + $0xc] sm:$0xf]
    %v681 = vld [vmem:[#allocation21] sm:$0x1]
    %v683 = vlaneseq
    %v684 = vshrl.u32 %v683, 7
    %v685 = vsub.s32 0, %v684
    %v686 = vrot.slane %v681, %v685
    %v692 = vunpack.c.l.b16 %v677
    %v693 = vunpack.c.l.b16 %v678
    %v694 = vunpack.c.l.b16 %v679
    %v695 = vunpack.c.l.b16 %v680
    %v696 = vpack.c.b16 %v693, %v692
    %v697 = vpack.c.b16 %v695, %v694
    %v701 = vsel %vm293, %v676, 0
    %703 = vmatprep.subr.bf16.mxu0 0
    %704 = vmatpush1.bf16.msra.mxu0 %v696
    %705 = vmatprep.subr.bf16.mxu0 0
    %706 = vmatpush1.bf16.msra.mxu0 %v697
    %707 = vmatprep.subr.bf16.mxu0 0
    %708 = vmatpush1.bf16.msra.mxu0 0
    %709 = vmatprep.subr.bf16.mxu0 0
    %710 = vmatpush1.bf16.msra.mxu0 0
    %711 = vmatprep.subr.bf16.mxu0 0
    %712 = vmatpush1.bf16.msra.mxu0 0
    %713 = vmatprep.subr.bf16.mxu0 0
    %714 = vmatpush1.bf16.msra.mxu0 0
    %715 = vmatprep.subr.bf16.mxu0 0
    %716 = vmatpush1.bf16.msra.mxu0 0
    %717 = vmatprep.subr.bf16.mxu0 0
    %718 = vmatpush1.bf16.msra.mxu0 0
    %719 = vmatprep.subr.bf16.mxu0 0
    %720 = vmatpush1.bf16.msra.mxu0 0
    %721 = vmatprep.subr.bf16.mxu0 0
    %722 = vmatpush1.bf16.msra.mxu0 0
    %723 = vmatprep.subr.bf16.mxu0 0
    %724 = vmatpush1.bf16.msra.mxu0 0
    %725 = vmatprep.subr.bf16.mxu0 0
    %726 = vmatpush1.bf16.msra.mxu0 0
    %727 = vmatprep.subr.bf16.mxu0 0
    %728 = vmatpush1.bf16.msra.mxu0 0
    %729 = vmatprep.subr.bf16.mxu0 0
    %730 = vmatpush1.bf16.msra.mxu0 0
    %731 = vmatprep.subr.bf16.mxu0 0
    %732 = vmatpush1.bf16.msra.mxu0 0
    %733 = vmatprep.subr.bf16.mxu0 0
    %734 = vmatpush1.bf16.msra.mxu0 0
    %735 = vmatprep.mubr.bf16.mxu0 0
    %736 = vmatmul.mubr.bf16.gmra.mrb[0].mxu0 %v701
    %v737 = vpop.f32.mrb[0].mxu0
    %v738 = vadd.f32 %v686, %v737
    %v739 = vpop.f32.mrb[0].mxu0
    %v740 = vpop.f32.mrb[0].mxu0
    %v741 = vpop.f32.mrb[0].mxu0
    %742 = vdwg.mxu0
    %s743 = sld [smem:[#allocation2 + $0x2]]
    %vm744 = vcmp.gt.f32.partialorder %v738, 0.0
    %v745 = vstv %s743
    %v746 = vmul.f32 %v745, %v738
    %v747 = vsel %vm744, %v738, %v746
    %v748 = vpack.c.bf16 %v747, %v747
    %v749 = vld [vmem:[%s14] sm:$0xf]
    %v750 = vld [vmem:[%s14 + $0x4] sm:$0xf]
    %v751 = vld [vmem:[%s14 + $0x8] sm:$0xf]
    %v752 = vld [vmem:[%s14 + $0xc] sm:$0xf]
    %v753 = vld [vmem:[#allocation22] sm:$0x1]
    %v755 = vlaneseq
    %v756 = vshrl.u32 %v755, 7
    %v757 = vsub.s32 0, %v756
    %v758 = vrot.slane %v753, %v757
    %v764 = vunpack.c.l.b16 %v749
    %v765 = vunpack.c.l.b16 %v750
    %v766 = vunpack.c.l.b16 %v751
    %v767 = vunpack.c.l.b16 %v752
    %v768 = vpack.c.b16 %v765, %v764
    %v769 = vpack.c.b16 %v767, %v766
    %v773 = vsel %vm293, %v748, 0
    %775 = vmatprep.subr.bf16.mxu0 0
    %776 = vmatpush1.bf16.msra.mxu0 %v768
    %777 = vmatprep.subr.bf16.mxu0 0
    %778 = vmatpush1.bf16.msra.mxu0 %v769
    %779 = vmatprep.subr.bf16.mxu0 0
    %780 = vmatpush1.bf16.msra.mxu0 0
    %781 = vmatprep.subr.bf16.mxu0 0
    %782 = vmatpush1.bf16.msra.mxu0 0
    %783 = vmatprep.subr.bf16.mxu0 0
    %784 = vmatpush1.bf16.msra.mxu0 0
    %785 = vmatprep.subr.bf16.mxu0 0
    %786 = vmatpush1.bf16.msra.mxu0 0
    %787 = vmatprep.subr.bf16.mxu0 0
    %788 = vmatpush1.bf16.msra.mxu0 0
    %789 = vmatprep.subr.bf16.mxu0 0
    %790 = vmatpush1.bf16.msra.mxu0 0
    %791 = vmatprep.subr.bf16.mxu0 0
    %792 = vmatpush1.bf16.msra.mxu0 0
    %793 = vmatprep.subr.bf16.mxu0 0
    %794 = vmatpush1.bf16.msra.mxu0 0
    %795 = vmatprep.subr.bf16.mxu0 0
    %796 = vmatpush1.bf16.msra.mxu0 0
    %797 = vmatprep.subr.bf16.mxu0 0
    %798 = vmatpush1.bf16.msra.mxu0 0
    %799 = vmatprep.subr.bf16.mxu0 0
    %800 = vmatpush1.bf16.msra.mxu0 0
    %801 = vmatprep.subr.bf16.mxu0 0
    %802 = vmatpush1.bf16.msra.mxu0 0
    %803 = vmatprep.subr.bf16.mxu0 0
    %804 = vmatpush1.bf16.msra.mxu0 0
    %805 = vmatprep.subr.bf16.mxu0 0
    %806 = vmatpush1.bf16.msra.mxu0 0
    %807 = vmatprep.mubr.bf16.mxu0 0
    %808 = vmatmul.mubr.bf16.gmra.mrb[0].mxu0 %v773
    %v809 = vpop.f32.mrb[0].mxu0
    %v810 = vadd.f32 %v758, %v809
    %v811 = vpop.f32.mrb[0].mxu0
    %v812 = vpop.f32.mrb[0].mxu0
    %v813 = vpop.f32.mrb[0].mxu0
    %814 = vdwg.mxu0
    %vm815 = vcmp.gt.f32.partialorder %v810, 0.0
    %v816 = vmul.f32 %v411, %v810
    %v817 = vsel %vm815, %v810, %v816
    %v818 = vpack.c.bf16 %v817, %v817
    %v819 = vld [vmem:[#allocation25] sm:$0xf]
    %v820 = vld [vmem:[#allocation25 + $0x4] sm:$0xf]
    %v821 = vld [vmem:[#allocation25 + $0x8] sm:$0xf]
    %v822 = vld [vmem:[#allocation25 + $0xc] sm:$0xf]
    %v827 = vunpack.c.l.b16 %v819
    %v828 = vunpack.c.l.b16 %v820
    %v829 = vunpack.c.l.b16 %v821
    %v830 = vunpack.c.l.b16 %v822
    %v831 = vpack.c.b16 %v828, %v827
    %v832 = vpack.c.b16 %v830, %v829
    %v836 = vsel %vm293, %v818, 0
    %838 = vmatprep.subr.bf16.mxu0 0
    %839 = vmatpush1.bf16.msra.mxu0 %v831
    %840 = vmatprep.subr.bf16.mxu0 0
    %841 = vmatpush1.bf16.msra.mxu0 %v832
    %842 = vmatprep.subr.bf16.mxu0 0
    %843 = vmatpush1.bf16.msra.mxu0 0
    %844 = vmatprep.subr.bf16.mxu0 0
    %845 = vmatpush1.bf16.msra.mxu0 0
    %846 = vmatprep.subr.bf16.mxu0 0
    %847 = vmatpush1.bf16.msra.mxu0 0
    %848 = vmatprep.subr.bf16.mxu0 0
    %849 = vmatpush1.bf16.msra.mxu0 0
    %850 = vmatprep.subr.bf16.mxu0 0
    %851 = vmatpush1.bf16.msra.mxu0 0
    %852 = vmatprep.subr.bf16.mxu0 0
    %853 = vmatpush1.bf16.msra.mxu0 0
    %854 = vmatprep.subr.bf16.mxu0 0
    %855 = vmatpush1.bf16.msra.mxu0 0
    %856 = vmatprep.subr.bf16.mxu0 0
    %857 = vmatpush1.bf16.msra.mxu0 0
    %858 = vmatprep.subr.bf16.mxu0 0
    %859 = vmatpush1.bf16.msra.mxu0 0
    %860 = vmatprep.subr.bf16.mxu0 0
    %861 = vmatpush1.bf16.msra.mxu0 0
    %862 = vmatprep.subr.bf16.mxu0 0
    %863 = vmatpush1.bf16.msra.mxu0 0
    %864 = vmatprep.subr.bf16.mxu0 0
    %865 = vmatpush1.bf16.msra.mxu0 0
    %866 = vmatprep.subr.bf16.mxu0 0
    %867 = vmatpush1.bf16.msra.mxu0 0
    %868 = vmatprep.subr.bf16.mxu0 0
    %869 = vmatpush1.bf16.msra.mxu0 0
    %870 = vmatprep.mubr.bf16.mxu0 0
    %871 = vmatmul.mubr.bf16.gmra.mrb[0].mxu0 %v836
    %v872 = vpop.f32.mrb[0].mxu0
    %v873 = vadd.f32 0.0, %v872
    %v874 = vpop.f32.mrb[0].mxu0
    %v875 = vpop.f32.mrb[0].mxu0
    %v876 = vpop.f32.mrb[0].mxu0
    %877 = vdwg.mxu0
    %v878 = vadd.f32 %v671, %v873
    %v879 = vld [vmem:[%s19] sm:$0x1]
    %v881 = vlaneseq
    %v882 = vshrl.u32 %v881, 7
    %v883 = vsub.s32 0, %v882
    %v884 = vrot.slane %v879, %v883
    %v886 = vadd.f32 %v878, %v884
    %s887 = sld [smem:[#allocation2 + $0x4]]
    %vm888 = vcmp.gt.f32.partialorder %v886, 0.0
    %v889 = vstv %s887
    %v890 = vmul.f32 %v889, %v886
    %v891 = vsel %vm888, %v886, %v890
    %v892 = vpack.c.bf16 %v891, %v891
    %v893 = vld [vmem:[#allocation27] sm:$0xf]
    %v894 = vld [vmem:[#allocation27 + $0x4] sm:$0xf]
    %v895 = vld [vmem:[#allocation27 + $0x8] sm:$0xf]
    %v896 = vld [vmem:[#allocation27 + $0xc] sm:$0xf]
    %v897 = vld [vmem:[%s21] sm:$0x1]
    %v899 = vlaneseq
    %v900 = vshrl.u32 %v899, 7
    %v901 = vsub.s32 0, %v900
    %v902 = vrot.slane %v897, %v901
    %v908 = vunpack.c.l.b16 %v893
    %v909 = vunpack.c.l.b16 %v894
    %v910 = vunpack.c.l.b16 %v895
    %v911 = vunpack.c.l.b16 %v896
    %v912 = vpack.c.b16 %v909, %v908
    %v913 = vpack.c.b16 %v911, %v910
    %v917 = vsel %vm293, %v892, 0
    %919 = vmatprep.subr.bf16.mxu0 0
    %920 = vmatpush1.bf16.msra.mxu0 %v912
    %921 = vmatprep.subr.bf16.mxu0 0
    %922 = vmatpush1.bf16.msra.mxu0 %v913
    %923 = vmatprep.subr.bf16.mxu0 0
    %924 = vmatpush1.bf16.msra.mxu0 0
    %925 = vmatprep.subr.bf16.mxu0 0
    %926 = vmatpush1.bf16.msra.mxu0 0
    %927 = vmatprep.subr.bf16.mxu0 0
    %928 = vmatpush1.bf16.msra.mxu0 0
    %929 = vmatprep.subr.bf16.mxu0 0
    %930 = vmatpush1.bf16.msra.mxu0 0
    %931 = vmatprep.subr.bf16.mxu0 0
    %932 = vmatpush1.bf16.msra.mxu0 0
    %933 = vmatprep.subr.bf16.mxu0 0
    %934 = vmatpush1.bf16.msra.mxu0 0
    %935 = vmatprep.subr.bf16.mxu0 0
    %936 = vmatpush1.bf16.msra.mxu0 0
    %937 = vmatprep.subr.bf16.mxu0 0
    %938 = vmatpush1.bf16.msra.mxu0 0
    %939 = vmatprep.subr.bf16.mxu0 0
    %940 = vmatpush1.bf16.msra.mxu0 0
    %941 = vmatprep.subr.bf16.mxu0 0
    %942 = vmatpush1.bf16.msra.mxu0 0
    %943 = vmatprep.subr.bf16.mxu0 0
    %944 = vmatpush1.bf16.msra.mxu0 0
    %945 = vmatprep.subr.bf16.mxu0 0
    %946 = vmatpush1.bf16.msra.mxu0 0
    %947 = vmatprep.subr.bf16.mxu0 0
    %948 = vmatpush1.bf16.msra.mxu0 0
    %949 = vmatprep.subr.bf16.mxu0 0
    %950 = vmatpush1.bf16.msra.mxu0 0
    %951 = vmatprep.mubr.bf16.mxu0 0
    %952 = vmatmul.mubr.bf16.gmra.mrb[0].mxu0 %v917
    %v953 = vpop.f32.mrb[0].mxu0
    %v954 = vadd.f32 %v902, %v953
    %v955 = vpop.f32.mrb[0].mxu0
    %v956 = vpop.f32.mrb[0].mxu0
    %v957 = vpop.f32.mrb[0].mxu0
    %958 = vdwg.mxu0
    %v959 = vpack.c.bf16 %v954, %v954
    %960 = vst [vmem:[#allocation28] sm:$0xf] %v959
    // Predicated region
    $region154: #{tpu_custom_call.1} parent=1 // pred_check
      _
    $region155: #{tpu_custom_call.1} parent=1 // pred_check_branch
      %962 = sbr.rel (0) target = $region157
    $region156: #{tpu_custom_call.1} parent=1 // pred_region
      %s964 = ssub.s32 64, 64
      %965 = vsyncadd [#allocation4], %s964
      %s967 = sshll.u32 [#allocation28], 4
      %s968 = int_to_ptr.vmem [resolvable:$true] %s967
      %970 = dma.vmem_to_hbm [thread:$0]  %s968, 64, %s22, [#allocation4]
    $region157: #{tpu_custom_call.1} parent=1 // pred_fallthru
      _
    // Predicated region
    $region158: #{tpu_custom_call.1} parent=1 // pred_check
      _
    $region159: #{tpu_custom_call.1} parent=1 // pred_check_branch
      %972 = sbr.rel (0) target = $region161
    $region160: #{tpu_custom_call.1} parent=1 // pred_region
      %973 = dma.done [#allocation4], 64
    $region161: #{tpu_custom_call.1} parent=1 // pred_fallthru
      _
    %974 = vsyncpa [#allocation3], 1
    %975 = vsyncpa [#allocation8], 1
    %976 = vsyncpa [#allocation11], 1
    %977 = vsyncpa [#allocation14], 1
    %978 = vsyncpa [#allocation17], 1
    %979 = vsyncpa [#allocation20], 1
    %980 = vsyncpa [#allocation23], 1
    %981 = vsyncpa [#allocation26], 1
    %982 = vsyncpa [#allocation4], 1
    %983 = vsyncpa [#allocation5], 1

</llo_original>
